<compile_context>
chip_gen: v7x
topology: tpu7x:2x2x1
jax: 0.10.0
libtpu: 0.0.40
codegen_flags: <defaults>
</compile_context>

<pallas_src>
import jax
import jax.numpy as jnp
from jax.experimental import pallas as pl
from jax.experimental.pallas import tpu as pltpu


def _generator_fused_kernel(x_ref, w1_ref, b1_ref, w2_ref, b2_ref, o_ref):
    """conv1(3x3 valid)+LReLU -> (x2 branch fold) -> conv2(3x3 valid)+LReLU.

    x_ref:  (H, W, NB)       f32 VMEM   (batch on lanes, NB multiple of 128)
    w1_ref: (9,)             f32 SMEM   conv1 kernel, flattened row-major
    b1_ref: (1,)             f32 SMEM
    w2_ref: (9,)             f32 SMEM   conv2 kernel, flattened, pre-scaled by 2
    b2_ref: (1,)             f32 SMEM
    o_ref:  (H-4, W-4, NB)   f32 VMEM
    """
    h, w, nb = x_ref.shape
    h1 = h - 2           # rows valid after conv1
    h2 = h - 4           # rows valid after conv2
    wo = w - 4           # cols valid after conv2

    x = x_ref[...]                                   # one VMEM read of the block

    # ---- stage 1: 3x3 valid conv (C=1) + LeakyReLU(0.2) --------------------
    # Accumulator keeps the full W extent; columns >= w-2 hold wrap garbage only.
    acc = jnp.full((h1, w, nb), b1_ref[0], jnp.float32)
    for dj in range(3):
        # dW tap: sublane roll (XLU). xs[:, j, :] == x[:, j + dj, :] for j < w-dj.
        xs = x if dj == 0 else pltpu.roll(x, shift=w - dj, axis=1)
        for di in range(3):
            # dH tap: leading-dim slice == address offset, no relayout.
            acc = acc + xs[di:di + h1] * w1_ref[3 * di + dj]
    t = jnp.maximum(acc, 0.2 * acc)                  # LeakyReLU(0.2) = max(x, .2x)

    # UNet/DFCAN identity stubs: img1 + img2 == 2*t; the factor 2 is folded into
    # w2 by the wrapper, so stage 2 consumes `t` directly (no HBM round trip).

    # ---- stage 2: 3x3 valid conv + LeakyReLU(0.2) ---------------------------
    acc = jnp.full((h2, w, nb), b2_ref[0], jnp.float32)
    for dj in range(3):
        ts = t if dj == 0 else pltpu.roll(t, shift=w - dj, axis=1)
        for di in range(3):
            acc = acc + ts[di:di + h2] * w2_ref[3 * di + dj]
    y = jnp.maximum(acc, 0.2 * acc)

    # Slice exactly once, at the store: drop the 4 garbage columns.  Lanes
    # (batch) stay fully dense, so the store is unmasked along lanes.
    o_ref[...] = y[:, :wo, :].astype(o_ref.dtype)


def _vmem_capacity_bytes():
    try:
        return int(pltpu.get_tpu_info().vmem_capacity_bytes)
    except Exception:                                 # pragma: no cover
        return 64 * 1024 * 1024                       # conservative (v7x physical)


def _pick_lane_block(n, h, w, itemsize=4):
    """Largest multiple-of-128 lane block whose working set fits the VMEM budget."""
    budget = _vmem_capacity_bytes() // 8              # headroom: dbl-buffers + temps
    ho, wo = h - 4, w - 4
    # bytes per lane column: double-buffered in/out blocks + ~4 live full-size temps
    per_lane = itemsize * (2 * h * w + 2 * ho * wo + 4 * h * w)
    nb = max(128, (budget // per_lane) // 128 * 128)
    n_ceil = pl.cdiv(n, 128) * 128
    nb = min(nb, n_ceil)
    # Keep >= 2 grid steps when the batch allows it, so the "parallel" axis can
    # split across v7x's two TensorCores and BlockSpec pipelining has overlap.
    if n_ceil >= 256:
        nb = min(nb, max(128, (n_ceil // 2) // 128 * 128))
    return nb


def init_generator_params(key):
    """Deterministic synthetic weights matching Conv2d(1, 1, 3) shapes."""
    k1, k2, k3, k4 = jax.random.split(key, 4)
    bound = 1.0 / jnp.sqrt(9.0)                       # fan_in = 1*3*3
    return {
        "w1": jax.random.uniform(k1, (3, 3), jnp.float32, -bound, bound),
        "b1": jax.random.uniform(k2, (1,), jnp.float32, -bound, bound),
        "w2": jax.random.uniform(k3, (3, 3), jnp.float32, -bound, bound),
        "b2": jax.random.uniform(k4, (1,), jnp.float32, -bound, bound),
    }


def generator_forward(img, params):
    """img: (N, 1, H, W) f32 -> (N, 1, H-4, W-4) f32 (two valid 3x3 convs)."""
    n, c, h, w = img.shape
    assert c == 1, "Generator is defined for single-channel input"
    assert h >= 5 and w >= 5, "two valid 3x3 convs need H, W >= 5"
    ho, wo = h - 4, w - 4

    nb = _pick_lane_block(n, h, w)
    n_pad = pl.cdiv(n, nb) * nb

    # Lane-dense layout: (H, W, N_pad) with the batch on the 128-wide lane axis.
    x = jnp.transpose(img[:, 0], (1, 2, 0))           # (H, W, N)
    if n_pad != n:
        x = jnp.pad(x, ((0, 0), (0, 0), (0, n_pad - n)))

    # Flatten 3x3 kernels to (9,) for SMEM (avoids 2-D SMEM word padding); fold
    # the identity-branch add (img1 + img2 == 2*t) into the conv2 weights: the
    # bias is NOT scaled since conv(2t, w2) + b2 == conv(t, 2*w2) + b2.
    w1_flat = params["w1"].reshape(9).astype(jnp.float32)
    w2_flat = (2.0 * params["w2"]).reshape(9).astype(jnp.float32)
    b1 = params["b1"].astype(jnp.float32)
    b2 = params["b2"].astype(jnp.float32)

    y = pl.pallas_call(
        _generator_fused_kernel,
        out_shape=jax.ShapeDtypeStruct((ho, wo, n_pad), jnp.float32),
        grid=(n_pad // nb,),
        in_specs=[
            pl.BlockSpec((h, w, nb), lambda i: (0, 0, i)),
            pl.BlockSpec(memory_space=pltpu.SMEM),    # conv1 weight (9,)
            pl.BlockSpec(memory_space=pltpu.SMEM),    # conv1 bias   (1,)
            pl.BlockSpec(memory_space=pltpu.SMEM),    # conv2 weight (9,), pre-scaled
            pl.BlockSpec(memory_space=pltpu.SMEM),    # conv2 bias   (1,)
        ],
        out_specs=pl.BlockSpec((ho, wo, nb), lambda i: (0, 0, i)),
        compiler_params=pltpu.CompilerParams(
            dimension_semantics=("parallel",),        # lane-block axis over both TCs
            vmem_limit_bytes=32 * 1024 * 1024,        # safe on v5e/v6e/v7x
        ),
    )(x, w1_flat, b1, w2_flat, b2)

    return jnp.transpose(y, (2, 0, 1))[:n, None, :, :]   # back to NCHW


def _reference_forward(img, params):
    """Pure-JAX reference (lax conv) for a correctness check."""
    def conv(x, wgt, b):
        w4 = wgt.reshape(1, 1, 3, 3)
        y = jax.lax.conv_general_dilated(
            x, w4, window_strides=(1, 1), padding="VALID",
            dimension_numbers=("NCHW", "OIHW", "NCHW"))
        return y + b[0]

    def lrelu(v):
        return jnp.where(v > 0, v, 0.2 * v)

    x = lrelu(conv(img, params["w1"], params["b1"]))
    x = x + x                      # identity UNet/DFCAN stubs: img1 + img2
    return lrelu(conv(x, params["w2"], params["b2"]))


if __name__ == "__main__":
    key = jax.random.PRNGKey(0)
    k_img, k_par = jax.random.split(key)

    N, C, H, W = 2, 1, 16, 16
    img = jax.random.normal(k_img, (N, C, H, W), jnp.float32)
    params = init_generator_params(k_par)

    out = jax.block_until_ready(generator_forward(img, params))
    ref = _reference_forward(img, params)

    assert out.shape == (N, 1, H - 4, W - 4), out.shape
    assert jnp.allclose(out, ref, atol=1e-5, rtol=1e-5), float(jnp.abs(out - ref).max())

    print("KERNEL_OK")
</pallas_src>

<mosaic_0001>
module attributes {stable_mosaic.version = 11 : i64} {
  func.func @_generator_fused_kernel(%arg0: i32, %arg1: memref<16x16x128xf32, #tpu.memory_space<vmem>>, %arg2: memref<9xf32, #tpu.memory_space<smem>>, %arg3: memref<1xf32, #tpu.memory_space<smem>>, %arg4: memref<9xf32, #tpu.memory_space<smem>>, %arg5: memref<1xf32, #tpu.memory_space<smem>>, %arg6: memref<12x12x128xf32, #tpu.memory_space<vmem>>) attributes {dimension_semantics = [#tpu.dimension_semantics<parallel>], iteration_bounds = array<i64: 1>, scalar_prefetch = 0 : i64, scratch_operands = 0 : i64, tpu.core_type = #tpu.core_type<tc>, window_params = [{transform_indices = @transform_0, window_bounds = array<i64: 16, 16, 128>}, {transform_indices = @transform_1, window_bounds = array<i64: 9>}, {transform_indices = @transform_2, window_bounds = array<i64: 1>}, {transform_indices = @transform_3, window_bounds = array<i64: 9>}, {transform_indices = @transform_4, window_bounds = array<i64: 1>}, {transform_indices = @transform_5, window_bounds = array<i64: 12, 12, 128>}]} {
    %c0 = arith.constant 0 : index
    %c0_0 = arith.constant 0 : index
    %c0_1 = arith.constant 0 : index
    %0 = vector.load %arg1[%c0, %c0_0, %c0_1] : memref<16x16x128xf32, #tpu.memory_space<vmem>>, vector<16x16x128xf32>
    %c0_2 = arith.constant 0 : index
    %1 = memref.load %arg3[%c0_2] : memref<1xf32, #tpu.memory_space<smem>>
    %2 = vector.broadcast %1 : f32 to vector<14x16x128xf32>
    %3 = vector.extract_strided_slice %0 {offsets = [0, 0, 0], sizes = [14, 16, 128], strides = [1, 1, 1]} : vector<16x16x128xf32> to vector<14x16x128xf32>
    %c0_3 = arith.constant 0 : index
    %4 = memref.load %arg2[%c0_3] : memref<9xf32, #tpu.memory_space<smem>>
    %5 = vector.broadcast %4 : f32 to vector<14x16x128xf32>
    %6 = arith.mulf %3, %5 : vector<14x16x128xf32>
    %7 = arith.addf %2, %6 : vector<14x16x128xf32>
    %8 = vector.extract_strided_slice %0 {offsets = [1, 0, 0], sizes = [14, 16, 128], strides = [1, 1, 1]} : vector<16x16x128xf32> to vector<14x16x128xf32>
    %c3 = arith.constant 3 : index
    %9 = memref.load %arg2[%c3] : memref<9xf32, #tpu.memory_space<smem>>
    %10 = vector.broadcast %9 : f32 to vector<14x16x128xf32>
    %11 = arith.mulf %8, %10 : vector<14x16x128xf32>
    %12 = arith.addf %7, %11 : vector<14x16x128xf32>
    %13 = vector.extract_strided_slice %0 {offsets = [2, 0, 0], sizes = [14, 16, 128], strides = [1, 1, 1]} : vector<16x16x128xf32> to vector<14x16x128xf32>
    %c6 = arith.constant 6 : index
    %14 = memref.load %arg2[%c6] : memref<9xf32, #tpu.memory_space<smem>>
    %15 = vector.broadcast %14 : f32 to vector<14x16x128xf32>
    %16 = arith.mulf %13, %15 : vector<14x16x128xf32>
    %17 = arith.addf %12, %16 : vector<14x16x128xf32>
    %c15_i32 = arith.constant 15 : i32
    %18 = tpu.dynamic_rotate %0 by %c15_i32 dim 1 : vector<16x16x128xf32>, i32 -> vector<16x16x128xf32>
    %19 = vector.extract_strided_slice %18 {offsets = [0, 0, 0], sizes = [14, 16, 128], strides = [1, 1, 1]} : vector<16x16x128xf32> to vector<14x16x128xf32>
    %c1 = arith.constant 1 : index
    %20 = memref.load %arg2[%c1] : memref<9xf32, #tpu.memory_space<smem>>
    %21 = vector.broadcast %20 : f32 to vector<14x16x128xf32>
    %22 = arith.mulf %19, %21 : vector<14x16x128xf32>
    %23 = arith.addf %17, %22 : vector<14x16x128xf32>
    %24 = vector.extract_strided_slice %18 {offsets = [1, 0, 0], sizes = [14, 16, 128], strides = [1, 1, 1]} : vector<16x16x128xf32> to vector<14x16x128xf32>
    %c4 = arith.constant 4 : index
    %25 = memref.load %arg2[%c4] : memref<9xf32, #tpu.memory_space<smem>>
    %26 = vector.broadcast %25 : f32 to vector<14x16x128xf32>
    %27 = arith.mulf %24, %26 : vector<14x16x128xf32>
    %28 = arith.addf %23, %27 : vector<14x16x128xf32>
    %29 = vector.extract_strided_slice %18 {offsets = [2, 0, 0], sizes = [14, 16, 128], strides = [1, 1, 1]} : vector<16x16x128xf32> to vector<14x16x128xf32>
    %c7 = arith.constant 7 : index
    %30 = memref.load %arg2[%c7] : memref<9xf32, #tpu.memory_space<smem>>
    %31 = vector.broadcast %30 : f32 to vector<14x16x128xf32>
    %32 = arith.mulf %29, %31 : vector<14x16x128xf32>
    %33 = arith.addf %28, %32 : vector<14x16x128xf32>
    %c14_i32 = arith.constant 14 : i32
    %34 = tpu.dynamic_rotate %0 by %c14_i32 dim 1 : vector<16x16x128xf32>, i32 -> vector<16x16x128xf32>
    %35 = vector.extract_strided_slice %34 {offsets = [0, 0, 0], sizes = [14, 16, 128], strides = [1, 1, 1]} : vector<16x16x128xf32> to vector<14x16x128xf32>
    %c2 = arith.constant 2 : index
    %36 = memref.load %arg2[%c2] : memref<9xf32, #tpu.memory_space<smem>>
    %37 = vector.broadcast %36 : f32 to vector<14x16x128xf32>
    %38 = arith.mulf %35, %37 : vector<14x16x128xf32>
    %39 = arith.addf %33, %38 : vector<14x16x128xf32>
    %40 = vector.extract_strided_slice %34 {offsets = [1, 0, 0], sizes = [14, 16, 128], strides = [1, 1, 1]} : vector<16x16x128xf32> to vector<14x16x128xf32>
    %c5 = arith.constant 5 : index
    %41 = memref.load %arg2[%c5] : memref<9xf32, #tpu.memory_space<smem>>
    %42 = vector.broadcast %41 : f32 to vector<14x16x128xf32>
    %43 = arith.mulf %40, %42 : vector<14x16x128xf32>
    %44 = arith.addf %39, %43 : vector<14x16x128xf32>
    %45 = vector.extract_strided_slice %34 {offsets = [2, 0, 0], sizes = [14, 16, 128], strides = [1, 1, 1]} : vector<16x16x128xf32> to vector<14x16x128xf32>
    %c8 = arith.constant 8 : index
    %46 = memref.load %arg2[%c8] : memref<9xf32, #tpu.memory_space<smem>>
    %47 = vector.broadcast %46 : f32 to vector<14x16x128xf32>
    %48 = arith.mulf %45, %47 : vector<14x16x128xf32>
    %49 = arith.addf %44, %48 : vector<14x16x128xf32>
    %cst = arith.constant 2.000000e-01 : f32
    %50 = vector.broadcast %cst : f32 to vector<14x16x128xf32>
    %51 = arith.mulf %50, %49 : vector<14x16x128xf32>
    %52 = arith.maximumf %49, %51 : vector<14x16x128xf32>
    %c0_4 = arith.constant 0 : index
    %53 = memref.load %arg5[%c0_4] : memref<1xf32, #tpu.memory_space<smem>>
    %54 = vector.broadcast %53 : f32 to vector<12x16x128xf32>
    %55 = vector.extract_strided_slice %52 {offsets = [0, 0, 0], sizes = [12, 16, 128], strides = [1, 1, 1]} : vector<14x16x128xf32> to vector<12x16x128xf32>
    %c0_5 = arith.constant 0 : index
    %56 = memref.load %arg4[%c0_5] : memref<9xf32, #tpu.memory_space<smem>>
    %57 = vector.broadcast %56 : f32 to vector<12x16x128xf32>
    %58 = arith.mulf %55, %57 : vector<12x16x128xf32>
    %59 = arith.addf %54, %58 : vector<12x16x128xf32>
    %60 = vector.extract_strided_slice %52 {offsets = [1, 0, 0], sizes = [12, 16, 128], strides = [1, 1, 1]} : vector<14x16x128xf32> to vector<12x16x128xf32>
    %c3_6 = arith.constant 3 : index
    %61 = memref.load %arg4[%c3_6] : memref<9xf32, #tpu.memory_space<smem>>
    %62 = vector.broadcast %61 : f32 to vector<12x16x128xf32>
    %63 = arith.mulf %60, %62 : vector<12x16x128xf32>
    %64 = arith.addf %59, %63 : vector<12x16x128xf32>
    %65 = vector.extract_strided_slice %52 {offsets = [2, 0, 0], sizes = [12, 16, 128], strides = [1, 1, 1]} : vector<14x16x128xf32> to vector<12x16x128xf32>
    %c6_7 = arith.constant 6 : index
    %66 = memref.load %arg4[%c6_7] : memref<9xf32, #tpu.memory_space<smem>>
    %67 = vector.broadcast %66 : f32 to vector<12x16x128xf32>
    %68 = arith.mulf %65, %67 : vector<12x16x128xf32>
    %69 = arith.addf %64, %68 : vector<12x16x128xf32>
    %c15_i32_8 = arith.constant 15 : i32
    %70 = tpu.dynamic_rotate %52 by %c15_i32_8 dim 1 : vector<14x16x128xf32>, i32 -> vector<14x16x128xf32>
    %71 = vector.extract_strided_slice %70 {offsets = [0, 0, 0], sizes = [12, 16, 128], strides = [1, 1, 1]} : vector<14x16x128xf32> to vector<12x16x128xf32>
    %c1_9 = arith.constant 1 : index
    %72 = memref.load %arg4[%c1_9] : memref<9xf32, #tpu.memory_space<smem>>
    %73 = vector.broadcast %72 : f32 to vector<12x16x128xf32>
    %74 = arith.mulf %71, %73 : vector<12x16x128xf32>
    %75 = arith.addf %69, %74 : vector<12x16x128xf32>
    %76 = vector.extract_strided_slice %70 {offsets = [1, 0, 0], sizes = [12, 16, 128], strides = [1, 1, 1]} : vector<14x16x128xf32> to vector<12x16x128xf32>
    %c4_10 = arith.constant 4 : index
    %77 = memref.load %arg4[%c4_10] : memref<9xf32, #tpu.memory_space<smem>>
    %78 = vector.broadcast %77 : f32 to vector<12x16x128xf32>
    %79 = arith.mulf %76, %78 : vector<12x16x128xf32>
    %80 = arith.addf %75, %79 : vector<12x16x128xf32>
    %81 = vector.extract_strided_slice %70 {offsets = [2, 0, 0], sizes = [12, 16, 128], strides = [1, 1, 1]} : vector<14x16x128xf32> to vector<12x16x128xf32>
    %c7_11 = arith.constant 7 : index
    %82 = memref.load %arg4[%c7_11] : memref<9xf32, #tpu.memory_space<smem>>
    %83 = vector.broadcast %82 : f32 to vector<12x16x128xf32>
    %84 = arith.mulf %81, %83 : vector<12x16x128xf32>
    %85 = arith.addf %80, %84 : vector<12x16x128xf32>
    %c14_i32_12 = arith.constant 14 : i32
    %86 = tpu.dynamic_rotate %52 by %c14_i32_12 dim 1 : vector<14x16x128xf32>, i32 -> vector<14x16x128xf32>
    %87 = vector.extract_strided_slice %86 {offsets = [0, 0, 0], sizes = [12, 16, 128], strides = [1, 1, 1]} : vector<14x16x128xf32> to vector<12x16x128xf32>
    %c2_13 = arith.constant 2 : index
    %88 = memref.load %arg4[%c2_13] : memref<9xf32, #tpu.memory_space<smem>>
    %89 = vector.broadcast %88 : f32 to vector<12x16x128xf32>
    %90 = arith.mulf %87, %89 : vector<12x16x128xf32>
    %91 = arith.addf %85, %90 : vector<12x16x128xf32>
    %92 = vector.extract_strided_slice %86 {offsets = [1, 0, 0], sizes = [12, 16, 128], strides = [1, 1, 1]} : vector<14x16x128xf32> to vector<12x16x128xf32>
    %c5_14 = arith.constant 5 : index
    %93 = memref.load %arg4[%c5_14] : memref<9xf32, #tpu.memory_space<smem>>
    %94 = vector.broadcast %93 : f32 to vector<12x16x128xf32>
    %95 = arith.mulf %92, %94 : vector<12x16x128xf32>
    %96 = arith.addf %91, %95 : vector<12x16x128xf32>
    %97 = vector.extract_strided_slice %86 {offsets = [2, 0, 0], sizes = [12, 16, 128], strides = [1, 1, 1]} : vector<14x16x128xf32> to vector<12x16x128xf32>
    %c8_15 = arith.constant 8 : index
    %98 = memref.load %arg4[%c8_15] : memref<9xf32, #tpu.memory_space<smem>>
    %99 = vector.broadcast %98 : f32 to vector<12x16x128xf32>
    %100 = arith.mulf %97, %99 : vector<12x16x128xf32>
    %101 = arith.addf %96, %100 : vector<12x16x128xf32>
    %cst_16 = arith.constant 2.000000e-01 : f32
    %102 = vector.broadcast %cst_16 : f32 to vector<12x16x128xf32>
    %103 = arith.mulf %102, %101 : vector<12x16x128xf32>
    %104 = arith.maximumf %101, %103 : vector<12x16x128xf32>
    %105 = vector.extract_strided_slice %104 {offsets = [0, 0, 0], sizes = [12, 12, 128], strides = [1, 1, 1]} : vector<12x16x128xf32> to vector<12x12x128xf32>
    %c0_17 = arith.constant 0 : index
    %c0_18 = arith.constant 0 : index
    %c0_19 = arith.constant 0 : index
    %106 = vector.load %arg6[%c0_17, %c0_18, %c0_19] : memref<12x12x128xf32, #tpu.memory_space<vmem>>, vector<12x12x128xf32>
    tpu.vector_store %arg6[%c0_17, %c0_18, %c0_19], %105 {strides = array<i32>} : memref<12x12x128xf32, #tpu.memory_space<vmem>>, vector<12x12x128xf32>,
    return
  }
  func.func @transform_0(%arg0: i32) -> (i32, i32, i32) {
    %c0_i32 = arith.constant 0 : i32
    %c0_i32_0 = arith.constant 0 : i32
    %c0_i32_1 = arith.constant 0 : i32
    return %c0_i32, %c0_i32_0, %arg0 : i32, i32, i32
  }
  func.func @transform_1(%arg0: i32) -> i32 {
    %c0_i32 = arith.constant 0 : i32
    %c0_i32_0 = arith.constant 0 : i32
    return %c0_i32 : i32
  }
  func.func @transform_2(%arg0: i32) -> i32 {
    %c0_i32 = arith.constant 0 : i32
    %c0_i32_0 = arith.constant 0 : i32
    return %c0_i32 : i32
  }
  func.func @transform_3(%arg0: i32) -> i32 {
    %c0_i32 = arith.constant 0 : i32
    %c0_i32_0 = arith.constant 0 : i32
    return %c0_i32 : i32
  }
  func.func @transform_4(%arg0: i32) -> i32 {
    %c0_i32 = arith.constant 0 : i32
    %c0_i32_0 = arith.constant 0 : i32
    return %c0_i32 : i32
  }
  func.func @transform_5(%arg0: i32) -> (i32, i32, i32) {
    %c0_i32 = arith.constant 0 : i32
    %c0_i32_0 = arith.constant 0 : i32
    %c0_i32_1 = arith.constant 0 : i32
    return %c0_i32, %c0_i32_0, %arg0 : i32, i32, i32
  }
}

</mosaic_0001>

<llo_original>
// kernel: tpu_custom_call.1
$region0: #{tpu_custom_call.1}
  #allocation0 [shape = 'u32[]', space=smem, size = 0x4, offset = 0x4, fixed_abs, tag = 'smem constant byte address 0x4 - core index']
  #allocation1 [shape = 'u32[144,128]{1,0:T(1,128)}', space=vmem, size = 0x12000, scoped, tag = 'internal scratch']
  #allocation2 [shape = 'f32[1]{0:T(128)S(6)}', space=smem, size = 0x200, scoped, tag = 'scoped memory for tpu_custom_call.1']
  #allocation3 [shape = 'f32[1]{0:T(128)S(6)}', space=smem, size = 0x200, scoped, tag = 'scoped memory for tpu_custom_call.1']
  %s0 = inlined_call_operand.hbm [shape: f32[16,16,128], index: 0, kind: input, shape index: {}]
  %s1 = inlined_call_operand.vmem [shape: f32[9], index: 1, kind: input, shape index: {}]
  %s2 = inlined_call_operand.<no memory space> [shape: f32[1], index: 2, kind: input, shape index: {}]
  %s3 = inlined_call_operand.vmem [shape: f32[9], index: 3, kind: input, shape index: {}]
  %s4 = inlined_call_operand.<no memory space> [shape: f32[1], index: 4, kind: input, shape index: {}]
  %s5 = inlined_call_operand.hbm [shape: f32[12,12,128], index: 5, kind: output, shape index: {}]
  %s6 = sld [smem:[#allocation0]]
  $region42: #{tpu_custom_call.1} parent=0
    _
  %s8 = ssub.s32 1, %s6
  %s9 = scalar_select 0, %s8, %s6
  %10 = sst [smem:[#allocation2]] %s2
  %11 = sst [smem:[#allocation3]] %s4
  $region1: #{tpu_custom_call.1} parent=0
    #allocation4 [shape = 'u8[131072]{0}', space=vmem, size = 0x20000, scoped, tag = 'input window, operand 0, single buffered']
    #allocation5 [shape = 's32[1]{0}', space=sflag, size = 0x4, scoped, tag = 'scoped memory for tpu_custom_call.1']
    #allocation6 [shape = 's32[1]{0}', space=sflag, size = 0x4, scoped, tag = 'scoped memory for tpu_custom_call.1']
    #allocation7 [shape = 's32[1]{0}', space=sflag, size = 0x4, scoped, tag = 'scoped memory for tpu_custom_call.1']
    #allocation8 [shape = 'u8[512]{0}', space=smem, size = 0x200, scoped, tag = 'input window, operand 1, single buffered']
    #allocation9 [shape = 'u8[512]{0}', space=smem, size = 0x200, scoped, tag = 'input window, operand 3, single buffered']
    #allocation10 [shape = 's32[1]{0}', space=sflag, size = 0x4, scoped, tag = 'scoped memory for tpu_custom_call.1']
    #allocation11 [shape = 'u8[98304]{0}', space=vmem, size = 0x18000, scoped, tag = 'output window, operand 0, single buffered']
    %12 = vsyncpa [#allocation5], 0
    %13 = vsyncpa [#allocation7], 0
    %14 = vsyncpa [#allocation10], 0
    %15 = vsyncpa [#allocation6], 0
    // Predicated region
    $region2: #{tpu_custom_call.1} parent=1 // pred_check
      _
    $region3: #{tpu_custom_call.1} parent=1 // pred_check_branch
      %17 = sbr.rel (0) target = $region5
    $region4: #{tpu_custom_call.1} parent=1 // pred_region
      %s19 = ssub.s32 4096, 4096
      %20 = vsyncadd [#allocation5], %s19
      %s21 = sshll.u32 [#allocation4], 4
      %s22 = int_to_ptr.vmem [resolvable:$true] %s21
      %27 = dma.hbm_to_vmem [thread:$0]  %s0, 4096, %s22, [#allocation5], 128, 128, 8
    $region5: #{tpu_custom_call.1} parent=1 // pred_fallthru
      _
    // Predicated region
    $region6: #{tpu_custom_call.1} parent=1 // pred_check
      _
    $region7: #{tpu_custom_call.1} parent=1 // pred_check_branch
      %29 = sbr.rel (0) target = $region9
    $region8: #{tpu_custom_call.1} parent=1 // pred_region
      %s31 = ssub.s32 16, 16
      %32 = vsyncadd [#allocation7], %s31
      %s34 = sshll.u32 %s1, 4
      %s35 = int_to_ptr.vmem [resolvable:$true] %s34
      %37 = dma.vmem_to_smem %s35, 16, [#allocation8], [#allocation7]
    $region9: #{tpu_custom_call.1} parent=1 // pred_fallthru
      _
    // Predicated region
    $region10: #{tpu_custom_call.1} parent=1 // pred_check
      _
    $region11: #{tpu_custom_call.1} parent=1 // pred_check_branch
      %39 = sbr.rel (0) target = $region13
    $region12: #{tpu_custom_call.1} parent=1 // pred_region
      _
    $region13: #{tpu_custom_call.1} parent=1 // pred_fallthru
      _
    // Predicated region
    $region14: #{tpu_custom_call.1} parent=1 // pred_check
      _
    $region15: #{tpu_custom_call.1} parent=1 // pred_check_branch
      %41 = sbr.rel (0) target = $region17
    $region16: #{tpu_custom_call.1} parent=1 // pred_region
      %s43 = ssub.s32 16, 16
      %44 = vsyncadd [#allocation10], %s43
      %s46 = sshll.u32 %s3, 4
      %s47 = int_to_ptr.vmem [resolvable:$true] %s46
      %49 = dma.vmem_to_smem %s47, 16, [#allocation9], [#allocation10]
    $region17: #{tpu_custom_call.1} parent=1 // pred_fallthru
      _
    // Predicated region
    $region18: #{tpu_custom_call.1} parent=1 // pred_check
      _
    $region19: #{tpu_custom_call.1} parent=1 // pred_check_branch
      %51 = sbr.rel (0) target = $region21
    $region20: #{tpu_custom_call.1} parent=1 // pred_region
      _
    $region21: #{tpu_custom_call.1} parent=1 // pred_fallthru
      _
    // Predicated region
    $region22: #{tpu_custom_call.1} parent=1 // pred_check
      _
    $region23: #{tpu_custom_call.1} parent=1 // pred_check_branch
      %53 = sbr.rel (0) target = $region25
    $region24: #{tpu_custom_call.1} parent=1 // pred_region
      %54 = dma.done [#allocation5], 4096
    $region25: #{tpu_custom_call.1} parent=1 // pred_fallthru
      _
    // Predicated region
    $region26: #{tpu_custom_call.1} parent=1 // pred_check
      _
    $region27: #{tpu_custom_call.1} parent=1 // pred_check_branch
      %56 = sbr.rel (0) target = $region29
    $region28: #{tpu_custom_call.1} parent=1 // pred_region
      %57 = dma.done [#allocation7], 16
    $region29: #{tpu_custom_call.1} parent=1 // pred_fallthru
      _
    // Predicated region
    $region30: #{tpu_custom_call.1} parent=1 // pred_check
      _
    $region31: #{tpu_custom_call.1} parent=1 // pred_check_branch
      %59 = sbr.rel (0) target = $region33
    $region32: #{tpu_custom_call.1} parent=1 // pred_region
      %60 = dma.done [#allocation10], 16
    $region33: #{tpu_custom_call.1} parent=1 // pred_fallthru
      _
    %61 = sfence
    %v62 = vld [vmem:[#allocation4] sm:$0xff]
    %v63 = vld [vmem:[#allocation4 + $0x8] sm:$0xff]
    %v64 = vld [vmem:[#allocation4 + $0x10] sm:$0xff]
    %v65 = vld [vmem:[#allocation4 + $0x18] sm:$0xff]
    %v66 = vld [vmem:[#allocation4 + $0x20] sm:$0xff]
    %v67 = vld [vmem:[#allocation4 + $0x28] sm:$0xff]
    %v68 = vld [vmem:[#allocation4 + $0x30] sm:$0xff]
    %v69 = vld [vmem:[#allocation4 + $0x38] sm:$0xff]
    %v70 = vld [vmem:[#allocation4 + $0x40] sm:$0xff]
    %v71 = vld [vmem:[#allocation4 + $0x48] sm:$0xff]
    %v72 = vld [vmem:[#allocation4 + $0x50] sm:$0xff]
    %v73 = vld [vmem:[#allocation4 + $0x58] sm:$0xff]
    %v74 = vld [vmem:[#allocation4 + $0x60] sm:$0xff]
    %v75 = vld [vmem:[#allocation4 + $0x68] sm:$0xff]
    %v76 = vld [vmem:[#allocation4 + $0x70] sm:$0xff]
    %v77 = vld [vmem:[#allocation4 + $0x78] sm:$0xff]
    %v78 = vld [vmem:[#allocation4 + $0x80] sm:$0xff]
    %v79 = vld [vmem:[#allocation4 + $0x88] sm:$0xff]
    %v80 = vld [vmem:[#allocation4 + $0x90] sm:$0xff]
    %v81 = vld [vmem:[#allocation4 + $0x98] sm:$0xff]
    %v82 = vld [vmem:[#allocation4 + $0xa0] sm:$0xff]
    %v83 = vld [vmem:[#allocation4 + $0xa8] sm:$0xff]
    %v84 = vld [vmem:[#allocation4 + $0xb0] sm:$0xff]
    %v85 = vld [vmem:[#allocation4 + $0xb8] sm:$0xff]
    %v86 = vld [vmem:[#allocation4 + $0xc0] sm:$0xff]
    %v87 = vld [vmem:[#allocation4 + $0xc8] sm:$0xff]
    %v88 = vld [vmem:[#allocation4 + $0xd0] sm:$0xff]
    %v89 = vld [vmem:[#allocation4 + $0xd8] sm:$0xff]
    %v90 = vld [vmem:[#allocation4 + $0xe0] sm:$0xff]
    %v91 = vld [vmem:[#allocation4 + $0xe8] sm:$0xff]
    %v92 = vld [vmem:[#allocation4 + $0xf0] sm:$0xff]
    %v93 = vld [vmem:[#allocation4 + $0xf8] sm:$0xff]
    %s94 = sld [smem:[#allocation2]]
    %v95 = vstv %s94
    %s96 = sld [smem:[#allocation8]]
    %v97 = vstv %s96
    %v98 = vmul.f32 %v62, %v97
    %v99 = vmul.f32 %v63, %v97
    %v100 = vmul.f32 %v64, %v97
    %v101 = vmul.f32 %v65, %v97
    %v102 = vmul.f32 %v66, %v97
    %v103 = vmul.f32 %v67, %v97
    %v104 = vmul.f32 %v68, %v97
    %v105 = vmul.f32 %v69, %v97
    %v106 = vmul.f32 %v70, %v97
    %v107 = vmul.f32 %v71, %v97
    %v108 = vmul.f32 %v72, %v97
    %v109 = vmul.f32 %v73, %v97
    %v110 = vmul.f32 %v74, %v97
    %v111 = vmul.f32 %v75, %v97
    %v112 = vmul.f32 %v76, %v97
    %v113 = vmul.f32 %v77, %v97
    %v114 = vmul.f32 %v78, %v97
    %v115 = vmul.f32 %v79, %v97
    %v116 = vmul.f32 %v80, %v97
    %v117 = vmul.f32 %v81, %v97
    %v118 = vmul.f32 %v82, %v97
    %v119 = vmul.f32 %v83, %v97
    %v120 = vmul.f32 %v84, %v97
    %v121 = vmul.f32 %v85, %v97
    %v122 = vmul.f32 %v86, %v97
    %v123 = vmul.f32 %v87, %v97
    %v124 = vmul.f32 %v88, %v97
    %v125 = vmul.f32 %v89, %v97
    %v126 = vadd.f32 %v95, %v98
    %v127 = vadd.f32 %v95, %v99
    %v128 = vadd.f32 %v95, %v100
    %v129 = vadd.f32 %v95, %v101
    %v130 = vadd.f32 %v95, %v102
    %v131 = vadd.f32 %v95, %v103
    %v132 = vadd.f32 %v95, %v104
    %v133 = vadd.f32 %v95, %v105
    %v134 = vadd.f32 %v95, %v106
    %v135 = vadd.f32 %v95, %v107
    %v136 = vadd.f32 %v95, %v108
    %v137 = vadd.f32 %v95, %v109
    %v138 = vadd.f32 %v95, %v110
    %v139 = vadd.f32 %v95, %v111
    %v140 = vadd.f32 %v95, %v112
    %v141 = vadd.f32 %v95, %v113
    %v142 = vadd.f32 %v95, %v114
    %v143 = vadd.f32 %v95, %v115
    %v144 = vadd.f32 %v95, %v116
    %v145 = vadd.f32 %v95, %v117
    %v146 = vadd.f32 %v95, %v118
    %v147 = vadd.f32 %v95, %v119
    %v148 = vadd.f32 %v95, %v120
    %v149 = vadd.f32 %v95, %v121
    %v150 = vadd.f32 %v95, %v122
    %v151 = vadd.f32 %v95, %v123
    %v152 = vadd.f32 %v95, %v124
    %v153 = vadd.f32 %v95, %v125
    %s154 = sld [smem:[#allocation8 + $0x3]]
    %v155 = vstv %s154
    %v156 = vmul.f32 %v64, %v155
    %v157 = vmul.f32 %v65, %v155
    %v158 = vmul.f32 %v66, %v155
    %v159 = vmul.f32 %v67, %v155
    %v160 = vmul.f32 %v68, %v155
    %v161 = vmul.f32 %v69, %v155
    %v162 = vmul.f32 %v70, %v155
    %v163 = vmul.f32 %v71, %v155
    %v164 = vmul.f32 %v72, %v155
    %v165 = vmul.f32 %v73, %v155
    %v166 = vmul.f32 %v74, %v155
    %v167 = vmul.f32 %v75, %v155
    %v168 = vmul.f32 %v76, %v155
    %v169 = vmul.f32 %v77, %v155
    %v170 = vmul.f32 %v78, %v155
    %v171 = vmul.f32 %v79, %v155
    %v172 = vmul.f32 %v80, %v155
    %v173 = vmul.f32 %v81, %v155
    %v174 = vmul.f32 %v82, %v155
    %v175 = vmul.f32 %v83, %v155
    %v176 = vmul.f32 %v84, %v155
    %v177 = vmul.f32 %v85, %v155
    %v178 = vmul.f32 %v86, %v155
    %v179 = vmul.f32 %v87, %v155
    %v180 = vmul.f32 %v88, %v155
    %v181 = vmul.f32 %v89, %v155
    %v182 = vmul.f32 %v90, %v155
    %v183 = vmul.f32 %v91, %v155
    %v184 = vadd.f32 %v126, %v156
    %v185 = vadd.f32 %v127, %v157
    %v186 = vadd.f32 %v128, %v158
    %v187 = vadd.f32 %v129, %v159
    %v188 = vadd.f32 %v130, %v160
    %v189 = vadd.f32 %v131, %v161
    %v190 = vadd.f32 %v132, %v162
    %v191 = vadd.f32 %v133, %v163
    %v192 = vadd.f32 %v134, %v164
    %v193 = vadd.f32 %v135, %v165
    %v194 = vadd.f32 %v136, %v166
    %v195 = vadd.f32 %v137, %v167
    %v196 = vadd.f32 %v138, %v168
    %v197 = vadd.f32 %v139, %v169
    %v198 = vadd.f32 %v140, %v170
    %v199 = vadd.f32 %v141, %v171
    %v200 = vadd.f32 %v142, %v172
    %v201 = vadd.f32 %v143, %v173
    %v202 = vadd.f32 %v144, %v174
    %v203 = vadd.f32 %v145, %v175
    %v204 = vadd.f32 %v146, %v176
    %v205 = vadd.f32 %v147, %v177
    %v206 = vadd.f32 %v148, %v178
    %v207 = vadd.f32 %v149, %v179
    %v208 = vadd.f32 %v150, %v180
    %v209 = vadd.f32 %v151, %v181
    %v210 = vadd.f32 %v152, %v182
    %v211 = vadd.f32 %v153, %v183
    %s212 = sld [smem:[#allocation8 + $0x6]]
    %v213 = vstv %s212
    %v214 = vmul.f32 %v66, %v213
    %v215 = vmul.f32 %v67, %v213
    %v216 = vmul.f32 %v68, %v213
    %v217 = vmul.f32 %v69, %v213
    %v218 = vmul.f32 %v70, %v213
    %v219 = vmul.f32 %v71, %v213
    %v220 = vmul.f32 %v72, %v213
    %v221 = vmul.f32 %v73, %v213
    %v222 = vmul.f32 %v74, %v213
    %v223 = vmul.f32 %v75, %v213
    %v224 = vmul.f32 %v76, %v213
    %v225 = vmul.f32 %v77, %v213
    %v226 = vmul.f32 %v78, %v213
    %v227 = vmul.f32 %v79, %v213
    %v228 = vmul.f32 %v80, %v213
    %v229 = vmul.f32 %v81, %v213
    %v230 = vmul.f32 %v82, %v213
    %v231 = vmul.f32 %v83, %v213
    %v232 = vmul.f32 %v84, %v213
    %v233 = vmul.f32 %v85, %v213
    %v234 = vmul.f32 %v86, %v213
    %v235 = vmul.f32 %v87, %v213
    %v236 = vmul.f32 %v88, %v213
    %v237 = vmul.f32 %v89, %v213
    %v238 = vmul.f32 %v90, %v213
    %v239 = vmul.f32 %v91, %v213
    %v240 = vmul.f32 %v92, %v213
    %v241 = vmul.f32 %v93, %v213
    %v242 = vadd.f32 %v184, %v214
    %v243 = vadd.f32 %v185, %v215
    %v244 = vadd.f32 %v186, %v216
    %v245 = vadd.f32 %v187, %v217
    %v246 = vadd.f32 %v188, %v218
    %v247 = vadd.f32 %v189, %v219
    %v248 = vadd.f32 %v190, %v220
    %v249 = vadd.f32 %v191, %v221
    %v250 = vadd.f32 %v192, %v222
    %v251 = vadd.f32 %v193, %v223
    %v252 = vadd.f32 %v194, %v224
    %v253 = vadd.f32 %v195, %v225
    %v254 = vadd.f32 %v196, %v226
    %v255 = vadd.f32 %v197, %v227
    %v256 = vadd.f32 %v198, %v228
    %v257 = vadd.f32 %v199, %v229
    %v258 = vadd.f32 %v200, %v230
    %v259 = vadd.f32 %v201, %v231
    %v260 = vadd.f32 %v202, %v232
    %v261 = vadd.f32 %v203, %v233
    %v262 = vadd.f32 %v204, %v234
    %v263 = vadd.f32 %v205, %v235
    %v264 = vadd.f32 %v206, %v236
    %v265 = vadd.f32 %v207, %v237
    %v266 = vadd.f32 %v208, %v238
    %v267 = vadd.f32 %v209, %v239
    %v268 = vadd.f32 %v210, %v240
    %v269 = vadd.f32 %v211, %v241
    %v270 = vrot.slane %v62, 1
    %v271 = vrot.slane %v64, 1
    %v272 = vrot.slane %v66, 1
    %v273 = vrot.slane %v68, 1
    %v274 = vrot.slane %v70, 1
    %v275 = vrot.slane %v72, 1
    %v276 = vrot.slane %v74, 1
    %v277 = vrot.slane %v76, 1
    %v278 = vrot.slane %v78, 1
    %v279 = vrot.slane %v80, 1
    %v280 = vrot.slane %v82, 1
    %v281 = vrot.slane %v84, 1
    %v282 = vrot.slane %v86, 1
    %v283 = vrot.slane %v88, 1
    %v284 = vrot.slane %v90, 1
    %v285 = vrot.slane %v92, 1
    %v286 = vrot.slane %v63, 1
    %v287 = vrot.slane %v65, 1
    %v288 = vrot.slane %v67, 1
    %v289 = vrot.slane %v69, 1
    %v290 = vrot.slane %v71, 1
    %v291 = vrot.slane %v73, 1
    %v292 = vrot.slane %v75, 1
    %v293 = vrot.slane %v77, 1
    %v294 = vrot.slane %v79, 1
    %v295 = vrot.slane %v81, 1
    %v296 = vrot.slane %v83, 1
    %v297 = vrot.slane %v85, 1
    %v298 = vrot.slane %v87, 1
    %v299 = vrot.slane %v89, 1
    %v300 = vrot.slane %v91, 1
    %v301 = vrot.slane %v93, 1
    %v302 = vlaneseq
    %v303 = vshrl.u32 %v302, 7
    %vm304 = vcmp.lt.s32.totalorder %v303, 7
    %v305 = vsel %vm304, %v270, %v286
    %v306 = vsel %vm304, %v271, %v287
    %v307 = vsel %vm304, %v272, %v288
    %v308 = vsel %vm304, %v273, %v289
    %v309 = vsel %vm304, %v274, %v290
    %v310 = vsel %vm304, %v275, %v291
    %v311 = vsel %vm304, %v276, %v292
    %v312 = vsel %vm304, %v277, %v293
    %v313 = vsel %vm304, %v278, %v294
    %v314 = vsel %vm304, %v279, %v295
    %v315 = vsel %vm304, %v280, %v296
    %v316 = vsel %vm304, %v281, %v297
    %v317 = vsel %vm304, %v282, %v298
    %v318 = vsel %vm304, %v283, %v299
    %v319 = vsel %vm304, %v284, %v300
    %v320 = vsel %vm304, %v285, %v301
    %v321 = vsel %vm304, %v286, %v270
    %v322 = vsel %vm304, %v287, %v271
    %v323 = vsel %vm304, %v288, %v272
    %v324 = vsel %vm304, %v289, %v273
    %v325 = vsel %vm304, %v290, %v274
    %v326 = vsel %vm304, %v291, %v275
    %v327 = vsel %vm304, %v292, %v276
    %v328 = vsel %vm304, %v293, %v277
    %v329 = vsel %vm304, %v294, %v278
    %v330 = vsel %vm304, %v295, %v279
    %v331 = vsel %vm304, %v296, %v280
    %v332 = vsel %vm304, %v297, %v281
    %v333 = vsel %vm304, %v298, %v282
    %v334 = vsel %vm304, %v299, %v283
    %v335 = vsel %vm304, %v300, %v284
    %v336 = vsel %vm304, %v301, %v285
    %s337 = sld [smem:[#allocation8 + $0x1]]
    %v338 = vstv %s337
    %v339 = vmul.f32 %v305, %v338
    %v340 = vmul.f32 %v321, %v338
    %v341 = vmul.f32 %v306, %v338
    %v342 = vmul.f32 %v322, %v338
    %v343 = vmul.f32 %v307, %v338
    %v344 = vmul.f32 %v323, %v338
    %v345 = vmul.f32 %v308, %v338
    %v346 = vmul.f32 %v324, %v338
    %v347 = vmul.f32 %v309, %v338
    %v348 = vmul.f32 %v325, %v338
    %v349 = vmul.f32 %v310, %v338
    %v350 = vmul.f32 %v326, %v338
    %v351 = vmul.f32 %v311, %v338
    %v352 = vmul.f32 %v327, %v338
    %v353 = vmul.f32 %v312, %v338
    %v354 = vmul.f32 %v328, %v338
    %v355 = vmul.f32 %v313, %v338
    %v356 = vmul.f32 %v329, %v338
    %v357 = vmul.f32 %v314, %v338
    %v358 = vmul.f32 %v330, %v338
    %v359 = vmul.f32 %v315, %v338
    %v360 = vmul.f32 %v331, %v338
    %v361 = vmul.f32 %v316, %v338
    %v362 = vmul.f32 %v332, %v338
    %v363 = vmul.f32 %v317, %v338
    %v364 = vmul.f32 %v333, %v338
    %v365 = vmul.f32 %v318, %v338
    %v366 = vmul.f32 %v334, %v338
    %v367 = vadd.f32 %v242, %v339
    %v368 = vadd.f32 %v243, %v340
    %v369 = vadd.f32 %v244, %v341
    %v370 = vadd.f32 %v245, %v342
    %v371 = vadd.f32 %v246, %v343
    %v372 = vadd.f32 %v247, %v344
    %v373 = vadd.f32 %v248, %v345
    %v374 = vadd.f32 %v249, %v346
    %v375 = vadd.f32 %v250, %v347
    %v376 = vadd.f32 %v251, %v348
    %v377 = vadd.f32 %v252, %v349
    %v378 = vadd.f32 %v253, %v350
    %v379 = vadd.f32 %v254, %v351
    %v380 = vadd.f32 %v255, %v352
    %v381 = vadd.f32 %v256, %v353
    %v382 = vadd.f32 %v257, %v354
    %v383 = vadd.f32 %v258, %v355
    %v384 = vadd.f32 %v259, %v356
    %v385 = vadd.f32 %v260, %v357
    %v386 = vadd.f32 %v261, %v358
    %v387 = vadd.f32 %v262, %v359
    %v388 = vadd.f32 %v263, %v360
    %v389 = vadd.f32 %v264, %v361
    %v390 = vadd.f32 %v265, %v362
    %v391 = vadd.f32 %v266, %v363
    %v392 = vadd.f32 %v267, %v364
    %v393 = vadd.f32 %v268, %v365
    %v394 = vadd.f32 %v269, %v366
    %s395 = sld [smem:[#allocation8 + $0x4]]
    %v396 = vstv %s395
    %v397 = vmul.f32 %v306, %v396
    %v398 = vmul.f32 %v322, %v396
    %v399 = vmul.f32 %v307, %v396
    %v400 = vmul.f32 %v323, %v396
    %v401 = vmul.f32 %v308, %v396
    %v402 = vmul.f32 %v324, %v396
    %v403 = vmul.f32 %v309, %v396
    %v404 = vmul.f32 %v325, %v396
    %v405 = vmul.f32 %v310, %v396
    %v406 = vmul.f32 %v326, %v396
    %v407 = vmul.f32 %v311, %v396
    %v408 = vmul.f32 %v327, %v396
    %v409 = vmul.f32 %v312, %v396
    %v410 = vmul.f32 %v328, %v396
    %v411 = vmul.f32 %v313, %v396
    %v412 = vmul.f32 %v329, %v396
    %v413 = vmul.f32 %v314, %v396
    %v414 = vmul.f32 %v330, %v396
    %v415 = vmul.f32 %v315, %v396
    %v416 = vmul.f32 %v331, %v396
    %v417 = vmul.f32 %v316, %v396
    %v418 = vmul.f32 %v332, %v396
    %v419 = vmul.f32 %v317, %v396
    %v420 = vmul.f32 %v333, %v396
    %v421 = vmul.f32 %v318, %v396
    %v422 = vmul.f32 %v334, %v396
    %v423 = vmul.f32 %v319, %v396
    %v424 = vmul.f32 %v335, %v396
    %v425 = vadd.f32 %v367, %v397
    %v426 = vadd.f32 %v368, %v398
    %v427 = vadd.f32 %v369, %v399
    %v428 = vadd.f32 %v370, %v400
    %v429 = vadd.f32 %v371, %v401
    %v430 = vadd.f32 %v372, %v402
    %v431 = vadd.f32 %v373, %v403
    %v432 = vadd.f32 %v374, %v404
    %v433 = vadd.f32 %v375, %v405
    %v434 = vadd.f32 %v376, %v406
    %v435 = vadd.f32 %v377, %v407
    %v436 = vadd.f32 %v378, %v408
    %v437 = vadd.f32 %v379, %v409
    %v438 = vadd.f32 %v380, %v410
    %v439 = vadd.f32 %v381, %v411
    %v440 = vadd.f32 %v382, %v412
    %v441 = vadd.f32 %v383, %v413
    %v442 = vadd.f32 %v384, %v414
    %v443 = vadd.f32 %v385, %v415
    %v444 = vadd.f32 %v386, %v416
    %v445 = vadd.f32 %v387, %v417
    %v446 = vadd.f32 %v388, %v418
    %v447 = vadd.f32 %v389, %v419
    %v448 = vadd.f32 %v390, %v420
    %v449 = vadd.f32 %v391, %v421
    %v450 = vadd.f32 %v392, %v422
    %v451 = vadd.f32 %v393, %v423
    %v452 = vadd.f32 %v394, %v424
    %s453 = sld [smem:[#allocation8 + $0x7]]
    %v454 = vstv %s453
    %v455 = vmul.f32 %v307, %v454
    %v456 = vmul.f32 %v323, %v454
    %v457 = vmul.f32 %v308, %v454
    %v458 = vmul.f32 %v324, %v454
    %v459 = vmul.f32 %v309, %v454
    %v460 = vmul.f32 %v325, %v454
    %v461 = vmul.f32 %v310, %v454
    %v462 = vmul.f32 %v326, %v454
    %v463 = vmul.f32 %v311, %v454
    %v464 = vmul.f32 %v327, %v454
    %v465 = vmul.f32 %v312, %v454
    %v466 = vmul.f32 %v328, %v454
    %v467 = vmul.f32 %v313, %v454
    %v468 = vmul.f32 %v329, %v454
    %v469 = vmul.f32 %v314, %v454
    %v470 = vmul.f32 %v330, %v454
    %v471 = vmul.f32 %v315, %v454
    %v472 = vmul.f32 %v331, %v454
    %v473 = vmul.f32 %v316, %v454
    %v474 = vmul.f32 %v332, %v454
    %v475 = vmul.f32 %v317, %v454
    %v476 = vmul.f32 %v333, %v454
    %v477 = vmul.f32 %v318, %v454
    %v478 = vmul.f32 %v334, %v454
    %v479 = vmul.f32 %v319, %v454
    %v480 = vmul.f32 %v335, %v454
    %v481 = vmul.f32 %v320, %v454
    %v482 = vmul.f32 %v336, %v454
    %v483 = vadd.f32 %v425, %v455
    %v484 = vadd.f32 %v426, %v456
    %v485 = vadd.f32 %v427, %v457
    %v486 = vadd.f32 %v428, %v458
    %v487 = vadd.f32 %v429, %v459
    %v488 = vadd.f32 %v430, %v460
    %v489 = vadd.f32 %v431, %v461
    %v490 = vadd.f32 %v432, %v462
    %v491 = vadd.f32 %v433, %v463
    %v492 = vadd.f32 %v434, %v464
    %v493 = vadd.f32 %v435, %v465
    %v494 = vadd.f32 %v436, %v466
    %v495 = vadd.f32 %v437, %v467
    %v496 = vadd.f32 %v438, %v468
    %v497 = vadd.f32 %v439, %v469
    %v498 = vadd.f32 %v440, %v470
    %v499 = vadd.f32 %v441, %v471
    %v500 = vadd.f32 %v442, %v472
    %v501 = vadd.f32 %v443, %v473
    %v502 = vadd.f32 %v444, %v474
    %v503 = vadd.f32 %v445, %v475
    %v504 = vadd.f32 %v446, %v476
    %v505 = vadd.f32 %v447, %v477
    %v506 = vadd.f32 %v448, %v478
    %v507 = vadd.f32 %v449, %v479
    %v508 = vadd.f32 %v450, %v480
    %v509 = vadd.f32 %v451, %v481
    %v510 = vadd.f32 %v452, %v482
    %v511 = vrot.slane %v62, 2
    %v512 = vrot.slane %v64, 2
    %v513 = vrot.slane %v66, 2
    %v514 = vrot.slane %v68, 2
    %v515 = vrot.slane %v70, 2
    %v516 = vrot.slane %v72, 2
    %v517 = vrot.slane %v74, 2
    %v518 = vrot.slane %v76, 2
    %v519 = vrot.slane %v78, 2
    %v520 = vrot.slane %v80, 2
    %v521 = vrot.slane %v82, 2
    %v522 = vrot.slane %v84, 2
    %v523 = vrot.slane %v86, 2
    %v524 = vrot.slane %v88, 2
    %v525 = vrot.slane %v90, 2
    %v526 = vrot.slane %v92, 2
    %v527 = vrot.slane %v63, 2
    %v528 = vrot.slane %v65, 2
    %v529 = vrot.slane %v67, 2
    %v530 = vrot.slane %v69, 2
    %v531 = vrot.slane %v71, 2
    %v532 = vrot.slane %v73, 2
    %v533 = vrot.slane %v75, 2
    %v534 = vrot.slane %v77, 2
    %v535 = vrot.slane %v79, 2
    %v536 = vrot.slane %v81, 2
    %v537 = vrot.slane %v83, 2
    %v538 = vrot.slane %v85, 2
    %v539 = vrot.slane %v87, 2
    %v540 = vrot.slane %v89, 2
    %v541 = vrot.slane %v91, 2
    %v542 = vrot.slane %v93, 2
    %vm543 = vcmp.lt.s32.totalorder %v303, 6
    %v544 = vsel %vm543, %v511, %v527
    %v545 = vsel %vm543, %v512, %v528
    %v546 = vsel %vm543, %v513, %v529
    %v547 = vsel %vm543, %v514, %v530
    %v548 = vsel %vm543, %v515, %v531
    %v549 = vsel %vm543, %v516, %v532
    %v550 = vsel %vm543, %v517, %v533
    %v551 = vsel %vm543, %v518, %v534
    %v552 = vsel %vm543, %v519, %v535
    %v553 = vsel %vm543, %v520, %v536
    %v554 = vsel %vm543, %v521, %v537
    %v555 = vsel %vm543, %v522, %v538
    %v556 = vsel %vm543, %v523, %v539
    %v557 = vsel %vm543, %v524, %v540
    %v558 = vsel %vm543, %v525, %v541
    %v559 = vsel %vm543, %v526, %v542
    %v560 = vsel %vm543, %v527, %v511
    %v561 = vsel %vm543, %v528, %v512
    %v562 = vsel %vm543, %v529, %v513
    %v563 = vsel %vm543, %v530, %v514
    %v564 = vsel %vm543, %v531, %v515
    %v565 = vsel %vm543, %v532, %v516
    %v566 = vsel %vm543, %v533, %v517
    %v567 = vsel %vm543, %v534, %v518
    %v568 = vsel %vm543, %v535, %v519
    %v569 = vsel %vm543, %v536, %v520
    %v570 = vsel %vm543, %v537, %v521
    %v571 = vsel %vm543, %v538, %v522
    %v572 = vsel %vm543, %v539, %v523
    %v573 = vsel %vm543, %v540, %v524
    %v574 = vsel %vm543, %v541, %v525
    %v575 = vsel %vm543, %v542, %v526
    %s576 = sld [smem:[#allocation8 + $0x2]]
    %v577 = vstv %s576
    %v578 = vmul.f32 %v544, %v577
    %v579 = vmul.f32 %v560, %v577
    %v580 = vmul.f32 %v545, %v577
    %v581 = vmul.f32 %v561, %v577
    %v582 = vmul.f32 %v546, %v577
    %v583 = vmul.f32 %v562, %v577
    %v584 = vmul.f32 %v547, %v577
    %v585 = vmul.f32 %v563, %v577
    %v586 = vmul.f32 %v548, %v577
    %v587 = vmul.f32 %v564, %v577
    %v588 = vmul.f32 %v549, %v577
    %v589 = vmul.f32 %v565, %v577
    %v590 = vmul.f32 %v550, %v577
    %v591 = vmul.f32 %v566, %v577
    %v592 = vmul.f32 %v551, %v577
    %v593 = vmul.f32 %v567, %v577
    %v594 = vmul.f32 %v552, %v577
    %v595 = vmul.f32 %v568, %v577
    %v596 = vmul.f32 %v553, %v577
    %v597 = vmul.f32 %v569, %v577
    %v598 = vmul.f32 %v554, %v577
    %v599 = vmul.f32 %v570, %v577
    %v600 = vmul.f32 %v555, %v577
    %v601 = vmul.f32 %v571, %v577
    %v602 = vmul.f32 %v556, %v577
    %v603 = vmul.f32 %v572, %v577
    %v604 = vmul.f32 %v557, %v577
    %v605 = vmul.f32 %v573, %v577
    %v606 = vadd.f32 %v483, %v578
    %v607 = vadd.f32 %v484, %v579
    %v608 = vadd.f32 %v485, %v580
    %v609 = vadd.f32 %v486, %v581
    %v610 = vadd.f32 %v487, %v582
    %v611 = vadd.f32 %v488, %v583
    %v612 = vadd.f32 %v489, %v584
    %v613 = vadd.f32 %v490, %v585
    %v614 = vadd.f32 %v491, %v586
    %v615 = vadd.f32 %v492, %v587
    %v616 = vadd.f32 %v493, %v588
    %v617 = vadd.f32 %v494, %v589
    %v618 = vadd.f32 %v495, %v590
    %v619 = vadd.f32 %v496, %v591
    %v620 = vadd.f32 %v497, %v592
    %v621 = vadd.f32 %v498, %v593
    %v622 = vadd.f32 %v499, %v594
    %v623 = vadd.f32 %v500, %v595
    %v624 = vadd.f32 %v501, %v596
    %v625 = vadd.f32 %v502, %v597
    %v626 = vadd.f32 %v503, %v598
    %v627 = vadd.f32 %v504, %v599
    %v628 = vadd.f32 %v505, %v600
    %v629 = vadd.f32 %v506, %v601
    %v630 = vadd.f32 %v507, %v602
    %v631 = vadd.f32 %v508, %v603
    %v632 = vadd.f32 %v509, %v604
    %v633 = vadd.f32 %v510, %v605
    %s634 = sld [smem:[#allocation8 + $0x5]]
    %v635 = vstv %s634
    %v636 = vmul.f32 %v545, %v635
    %v637 = vmul.f32 %v561, %v635
    %v638 = vmul.f32 %v546, %v635
    %v639 = vmul.f32 %v562, %v635
    %v640 = vmul.f32 %v547, %v635
    %v641 = vmul.f32 %v563, %v635
    %v642 = vmul.f32 %v548, %v635
    %v643 = vmul.f32 %v564, %v635
    %v644 = vmul.f32 %v549, %v635
    %v645 = vmul.f32 %v565, %v635
    %v646 = vmul.f32 %v550, %v635
    %v647 = vmul.f32 %v566, %v635
    %v648 = vmul.f32 %v551, %v635
    %v649 = vmul.f32 %v567, %v635
    %v650 = vmul.f32 %v552, %v635
    %v651 = vmul.f32 %v568, %v635
    %v652 = vmul.f32 %v553, %v635
    %v653 = vmul.f32 %v569, %v635
    %v654 = vmul.f32 %v554, %v635
    %v655 = vmul.f32 %v570, %v635
    %v656 = vmul.f32 %v555, %v635
    %v657 = vmul.f32 %v571, %v635
    %v658 = vmul.f32 %v556, %v635
    %v659 = vmul.f32 %v572, %v635
    %v660 = vmul.f32 %v557, %v635
    %v661 = vmul.f32 %v573, %v635
    %v662 = vmul.f32 %v558, %v635
    %v663 = vmul.f32 %v574, %v635
    %v664 = vadd.f32 %v606, %v636
    %v665 = vadd.f32 %v607, %v637
    %v666 = vadd.f32 %v608, %v638
    %v667 = vadd.f32 %v609, %v639
    %v668 = vadd.f32 %v610, %v640
    %v669 = vadd.f32 %v611, %v641
    %v670 = vadd.f32 %v612, %v642
    %v671 = vadd.f32 %v613, %v643
    %v672 = vadd.f32 %v614, %v644
    %v673 = vadd.f32 %v615, %v645
    %v674 = vadd.f32 %v616, %v646
    %v675 = vadd.f32 %v617, %v647
    %v676 = vadd.f32 %v618, %v648
    %v677 = vadd.f32 %v619, %v649
    %v678 = vadd.f32 %v620, %v650
    %v679 = vadd.f32 %v621, %v651
    %v680 = vadd.f32 %v622, %v652
    %v681 = vadd.f32 %v623, %v653
    %v682 = vadd.f32 %v624, %v654
    %v683 = vadd.f32 %v625, %v655
    %v684 = vadd.f32 %v626, %v656
    %v685 = vadd.f32 %v627, %v657
    %v686 = vadd.f32 %v628, %v658
    %v687 = vadd.f32 %v629, %v659
    %v688 = vadd.f32 %v630, %v660
    %v689 = vadd.f32 %v631, %v661
    %v690 = vadd.f32 %v632, %v662
    %v691 = vadd.f32 %v633, %v663
    %s692 = sld [smem:[#allocation8 + $0x8]]
    %v693 = vstv %s692
    %v694 = vmul.f32 %v546, %v693
    %v695 = vmul.f32 %v562, %v693
    %v696 = vmul.f32 %v547, %v693
    %v697 = vmul.f32 %v563, %v693
    %v698 = vmul.f32 %v548, %v693
    %v699 = vmul.f32 %v564, %v693
    %v700 = vmul.f32 %v549, %v693
    %v701 = vmul.f32 %v565, %v693
    %v702 = vmul.f32 %v550, %v693
    %v703 = vmul.f32 %v566, %v693
    %v704 = vmul.f32 %v551, %v693
    %v705 = vmul.f32 %v567, %v693
    %v706 = vmul.f32 %v552, %v693
    %v707 = vmul.f32 %v568, %v693
    %v708 = vmul.f32 %v553, %v693
    %v709 = vmul.f32 %v569, %v693
    %v710 = vmul.f32 %v554, %v693
    %v711 = vmul.f32 %v570, %v693
    %v712 = vmul.f32 %v555, %v693
    %v713 = vmul.f32 %v571, %v693
    %v714 = vmul.f32 %v556, %v693
    %v715 = vmul.f32 %v572, %v693
    %v716 = vmul.f32 %v557, %v693
    %v717 = vmul.f32 %v573, %v693
    %v718 = vmul.f32 %v558, %v693
    %v719 = vmul.f32 %v574, %v693
    %v720 = vmul.f32 %v559, %v693
    %v721 = vmul.f32 %v575, %v693
    %v722 = vadd.f32 %v664, %v694
    %v723 = vadd.f32 %v665, %v695
    %v724 = vadd.f32 %v666, %v696
    %v725 = vadd.f32 %v667, %v697
    %v726 = vadd.f32 %v668, %v698
    %v727 = vadd.f32 %v669, %v699
    %v728 = vadd.f32 %v670, %v700
    %v729 = vadd.f32 %v671, %v701
    %v730 = vadd.f32 %v672, %v702
    %v731 = vadd.f32 %v673, %v703
    %v732 = vadd.f32 %v674, %v704
    %v733 = vadd.f32 %v675, %v705
    %v734 = vadd.f32 %v676, %v706
    %v735 = vadd.f32 %v677, %v707
    %v736 = vadd.f32 %v678, %v708
    %v737 = vadd.f32 %v679, %v709
    %v738 = vadd.f32 %v680, %v710
    %v739 = vadd.f32 %v681, %v711
    %v740 = vadd.f32 %v682, %v712
    %v741 = vadd.f32 %v683, %v713
    %v742 = vadd.f32 %v684, %v714
    %v743 = vadd.f32 %v685, %v715
    %v744 = vadd.f32 %v686, %v716
    %v745 = vadd.f32 %v687, %v717
    %v746 = vadd.f32 %v688, %v718
    %v747 = vadd.f32 %v689, %v719
    %v748 = vadd.f32 %v690, %v720
    %v749 = vadd.f32 %v691, %v721
    %v750 = vmul.f32 %v722, 0.2
    %v751 = vmul.f32 %v723, 0.2
    %v752 = vmul.f32 %v724, 0.2
    %v753 = vmul.f32 %v725, 0.2
    %v754 = vmul.f32 %v726, 0.2
    %v755 = vmul.f32 %v727, 0.2
    %v756 = vmul.f32 %v728, 0.2
    %v757 = vmul.f32 %v729, 0.2
    %v758 = vmul.f32 %v730, 0.2
    %v759 = vmul.f32 %v731, 0.2
    %v760 = vmul.f32 %v732, 0.2
    %v761 = vmul.f32 %v733, 0.2
    %v762 = vmul.f32 %v734, 0.2
    %v763 = vmul.f32 %v735, 0.2
    %v764 = vmul.f32 %v736, 0.2
    %v765 = vmul.f32 %v737, 0.2
    %v766 = vmul.f32 %v738, 0.2
    %v767 = vmul.f32 %v739, 0.2
    %v768 = vmul.f32 %v740, 0.2
    %v769 = vmul.f32 %v741, 0.2
    %v770 = vmul.f32 %v742, 0.2
    %v771 = vmul.f32 %v743, 0.2
    %v772 = vmul.f32 %v744, 0.2
    %v773 = vmul.f32 %v745, 0.2
    %v774 = vmul.f32 %v746, 0.2
    %v775 = vmul.f32 %v747, 0.2
    %v776 = vmul.f32 %v748, 0.2
    %v777 = vmul.f32 %v749, 0.2
    %v778 = vmax.f32 %v722, %v750
    %v779 = vmax.f32 %v723, %v751
    %v780 = vmax.f32 %v724, %v752
    %v781 = vmax.f32 %v725, %v753
    %v782 = vmax.f32 %v726, %v754
    %v783 = vmax.f32 %v727, %v755
    %v784 = vmax.f32 %v728, %v756
    %v785 = vmax.f32 %v729, %v757
    %v786 = vmax.f32 %v730, %v758
    %v787 = vmax.f32 %v731, %v759
    %v788 = vmax.f32 %v732, %v760
    %v789 = vmax.f32 %v733, %v761
    %v790 = vmax.f32 %v734, %v762
    %v791 = vmax.f32 %v735, %v763
    %v792 = vmax.f32 %v736, %v764
    %v793 = vmax.f32 %v737, %v765
    %v794 = vmax.f32 %v738, %v766
    %v795 = vmax.f32 %v739, %v767
    %v796 = vmax.f32 %v740, %v768
    %v797 = vmax.f32 %v741, %v769
    %v798 = vmax.f32 %v742, %v770
    %v799 = vmax.f32 %v743, %v771
    %v800 = vmax.f32 %v744, %v772
    %v801 = vmax.f32 %v745, %v773
    %v802 = vmax.f32 %v746, %v774
    %v803 = vmax.f32 %v747, %v775
    %v804 = vmax.f32 %v748, %v776
    %v805 = vmax.f32 %v749, %v777
    %s806 = sld [smem:[#allocation3]]
    %v807 = vstv %s806
    %s808 = sld [smem:[#allocation9]]
    %v809 = vstv %s808
    %v810 = vmul.f32 %v778, %v809
    %v811 = vmul.f32 %v779, %v809
    %v812 = vmul.f32 %v780, %v809
    %v813 = vmul.f32 %v781, %v809
    %v814 = vmul.f32 %v782, %v809
    %v815 = vmul.f32 %v783, %v809
    %v816 = vmul.f32 %v784, %v809
    %v817 = vmul.f32 %v785, %v809
    %v818 = vmul.f32 %v786, %v809
    %v819 = vmul.f32 %v787, %v809
    %v820 = vmul.f32 %v788, %v809
    %v821 = vmul.f32 %v789, %v809
    %v822 = vmul.f32 %v790, %v809
    %v823 = vmul.f32 %v791, %v809
    %v824 = vmul.f32 %v792, %v809
    %v825 = vmul.f32 %v793, %v809
    %v826 = vmul.f32 %v794, %v809
    %v827 = vmul.f32 %v795, %v809
    %v828 = vmul.f32 %v796, %v809
    %v829 = vmul.f32 %v797, %v809
    %v830 = vmul.f32 %v798, %v809
    %v831 = vmul.f32 %v799, %v809
    %v832 = vmul.f32 %v800, %v809
    %v833 = vmul.f32 %v801, %v809
    %v834 = vadd.f32 %v807, %v810
    %v835 = vadd.f32 %v807, %v811
    %v836 = vadd.f32 %v807, %v812
    %v837 = vadd.f32 %v807, %v813
    %v838 = vadd.f32 %v807, %v814
    %v839 = vadd.f32 %v807, %v815
    %v840 = vadd.f32 %v807, %v816
    %v841 = vadd.f32 %v807, %v817
    %v842 = vadd.f32 %v807, %v818
    %v843 = vadd.f32 %v807, %v819
    %v844 = vadd.f32 %v807, %v820
    %v845 = vadd.f32 %v807, %v821
    %v846 = vadd.f32 %v807, %v822
    %v847 = vadd.f32 %v807, %v823
    %v848 = vadd.f32 %v807, %v824
    %v849 = vadd.f32 %v807, %v825
    %v850 = vadd.f32 %v807, %v826
    %v851 = vadd.f32 %v807, %v827
    %v852 = vadd.f32 %v807, %v828
    %v853 = vadd.f32 %v807, %v829
    %v854 = vadd.f32 %v807, %v830
    %v855 = vadd.f32 %v807, %v831
    %v856 = vadd.f32 %v807, %v832
    %v857 = vadd.f32 %v807, %v833
    %s858 = sld [smem:[#allocation9 + $0x3]]
    %v859 = vstv %s858
    %v860 = vmul.f32 %v780, %v859
    %v861 = vmul.f32 %v781, %v859
    %v862 = vmul.f32 %v782, %v859
    %v863 = vmul.f32 %v783, %v859
    %v864 = vmul.f32 %v784, %v859
    %v865 = vmul.f32 %v785, %v859
    %v866 = vmul.f32 %v786, %v859
    %v867 = vmul.f32 %v787, %v859
    %v868 = vmul.f32 %v788, %v859
    %v869 = vmul.f32 %v789, %v859
    %v870 = vmul.f32 %v790, %v859
    %v871 = vmul.f32 %v791, %v859
    %v872 = vmul.f32 %v792, %v859
    %v873 = vmul.f32 %v793, %v859
    %v874 = vmul.f32 %v794, %v859
    %v875 = vmul.f32 %v795, %v859
    %v876 = vmul.f32 %v796, %v859
    %v877 = vmul.f32 %v797, %v859
    %v878 = vmul.f32 %v798, %v859
    %v879 = vmul.f32 %v799, %v859
    %v880 = vmul.f32 %v800, %v859
    %v881 = vmul.f32 %v801, %v859
    %v882 = vmul.f32 %v802, %v859
    %v883 = vmul.f32 %v803, %v859
    %v884 = vadd.f32 %v834, %v860
    %v885 = vadd.f32 %v835, %v861
    %v886 = vadd.f32 %v836, %v862
    %v887 = vadd.f32 %v837, %v863
    %v888 = vadd.f32 %v838, %v864
    %v889 = vadd.f32 %v839, %v865
    %v890 = vadd.f32 %v840, %v866
    %v891 = vadd.f32 %v841, %v867
    %v892 = vadd.f32 %v842, %v868
    %v893 = vadd.f32 %v843, %v869
    %v894 = vadd.f32 %v844, %v870
    %v895 = vadd.f32 %v845, %v871
    %v896 = vadd.f32 %v846, %v872
    %v897 = vadd.f32 %v847, %v873
    %v898 = vadd.f32 %v848, %v874
    %v899 = vadd.f32 %v849, %v875
    %v900 = vadd.f32 %v850, %v876
    %v901 = vadd.f32 %v851, %v877
    %v902 = vadd.f32 %v852, %v878
    %v903 = vadd.f32 %v853, %v879
    %v904 = vadd.f32 %v854, %v880
    %v905 = vadd.f32 %v855, %v881
    %v906 = vadd.f32 %v856, %v882
    %v907 = vadd.f32 %v857, %v883
    %s908 = sld [smem:[#allocation9 + $0x6]]
    %v909 = vstv %s908
    %v910 = vmul.f32 %v782, %v909
    %v911 = vmul.f32 %v783, %v909
    %v912 = vmul.f32 %v784, %v909
    %v913 = vmul.f32 %v785, %v909
    %v914 = vmul.f32 %v786, %v909
    %v915 = vmul.f32 %v787, %v909
    %v916 = vmul.f32 %v788, %v909
    %v917 = vmul.f32 %v789, %v909
    %v918 = vmul.f32 %v790, %v909
    %v919 = vmul.f32 %v791, %v909
    %v920 = vmul.f32 %v792, %v909
    %v921 = vmul.f32 %v793, %v909
    %v922 = vmul.f32 %v794, %v909
    %v923 = vmul.f32 %v795, %v909
    %v924 = vmul.f32 %v796, %v909
    %v925 = vmul.f32 %v797, %v909
    %v926 = vmul.f32 %v798, %v909
    %v927 = vmul.f32 %v799, %v909
    %v928 = vmul.f32 %v800, %v909
    %v929 = vmul.f32 %v801, %v909
    %v930 = vmul.f32 %v802, %v909
    %v931 = vmul.f32 %v803, %v909
    %v932 = vmul.f32 %v804, %v909
    %v933 = vmul.f32 %v805, %v909
    %v934 = vadd.f32 %v884, %v910
    %v935 = vadd.f32 %v885, %v911
    %v936 = vadd.f32 %v886, %v912
    %v937 = vadd.f32 %v887, %v913
    %v938 = vadd.f32 %v888, %v914
    %v939 = vadd.f32 %v889, %v915
    %v940 = vadd.f32 %v890, %v916
    %v941 = vadd.f32 %v891, %v917
    %v942 = vadd.f32 %v892, %v918
    %v943 = vadd.f32 %v893, %v919
    %v944 = vadd.f32 %v894, %v920
    %v945 = vadd.f32 %v895, %v921
    %v946 = vadd.f32 %v896, %v922
    %v947 = vadd.f32 %v897, %v923
    %v948 = vadd.f32 %v898, %v924
    %v949 = vadd.f32 %v899, %v925
    %v950 = vadd.f32 %v900, %v926
    %v951 = vadd.f32 %v901, %v927
    %v952 = vadd.f32 %v902, %v928
    %v953 = vadd.f32 %v903, %v929
    %v954 = vadd.f32 %v904, %v930
    %v955 = vadd.f32 %v905, %v931
    %v956 = vadd.f32 %v906, %v932
    %v957 = vadd.f32 %v907, %v933
    %v958 = vrot.slane %v778, 1
    %v959 = vrot.slane %v780, 1
    %v960 = vrot.slane %v782, 1
    %v961 = vrot.slane %v784, 1
    %v962 = vrot.slane %v786, 1
    %v963 = vrot.slane %v788, 1
    %v964 = vrot.slane %v790, 1
    %v965 = vrot.slane %v792, 1
    %v966 = vrot.slane %v794, 1
    %v967 = vrot.slane %v796, 1
    %v968 = vrot.slane %v798, 1
    %v969 = vrot.slane %v800, 1
    %v970 = vrot.slane %v802, 1
    %v971 = vrot.slane %v804, 1
    %v972 = vrot.slane %v779, 1
    %v973 = vrot.slane %v781, 1
    %v974 = vrot.slane %v783, 1
    %v975 = vrot.slane %v785, 1
    %v976 = vrot.slane %v787, 1
    %v977 = vrot.slane %v789, 1
    %v978 = vrot.slane %v791, 1
    %v979 = vrot.slane %v793, 1
    %v980 = vrot.slane %v795, 1
    %v981 = vrot.slane %v797, 1
    %v982 = vrot.slane %v799, 1
    %v983 = vrot.slane %v801, 1
    %v984 = vrot.slane %v803, 1
    %v985 = vrot.slane %v805, 1
    %v986 = vsel %vm304, %v958, %v972
    %v987 = vsel %vm304, %v959, %v973
    %v988 = vsel %vm304, %v960, %v974
    %v989 = vsel %vm304, %v961, %v975
    %v990 = vsel %vm304, %v962, %v976
    %v991 = vsel %vm304, %v963, %v977
    %v992 = vsel %vm304, %v964, %v978
    %v993 = vsel %vm304, %v965, %v979
    %v994 = vsel %vm304, %v966, %v980
    %v995 = vsel %vm304, %v967, %v981
    %v996 = vsel %vm304, %v968, %v982
    %v997 = vsel %vm304, %v969, %v983
    %v998 = vsel %vm304, %v970, %v984
    %v999 = vsel %vm304, %v971, %v985
    %v1000 = vsel %vm304, %v972, %v958
    %v1001 = vsel %vm304, %v973, %v959
    %v1002 = vsel %vm304, %v974, %v960
    %v1003 = vsel %vm304, %v975, %v961
    %v1004 = vsel %vm304, %v976, %v962
    %v1005 = vsel %vm304, %v977, %v963
    %v1006 = vsel %vm304, %v978, %v964
    %v1007 = vsel %vm304, %v979, %v965
    %v1008 = vsel %vm304, %v980, %v966
    %v1009 = vsel %vm304, %v981, %v967
    %v1010 = vsel %vm304, %v982, %v968
    %v1011 = vsel %vm304, %v983, %v969
    %v1012 = vsel %vm304, %v984, %v970
    %v1013 = vsel %vm304, %v985, %v971
    %s1014 = sld [smem:[#allocation9 + $0x1]]
    %v1015 = vstv %s1014
    %v1016 = vmul.f32 %v986, %v1015
    %v1017 = vmul.f32 %v1000, %v1015
    %v1018 = vmul.f32 %v987, %v1015
    %v1019 = vmul.f32 %v1001, %v1015
    %v1020 = vmul.f32 %v988, %v1015
    %v1021 = vmul.f32 %v1002, %v1015
    %v1022 = vmul.f32 %v989, %v1015
    %v1023 = vmul.f32 %v1003, %v1015
    %v1024 = vmul.f32 %v990, %v1015
    %v1025 = vmul.f32 %v1004, %v1015
    %v1026 = vmul.f32 %v991, %v1015
    %v1027 = vmul.f32 %v1005, %v1015
    %v1028 = vmul.f32 %v992, %v1015
    %v1029 = vmul.f32 %v1006, %v1015
    %v1030 = vmul.f32 %v993, %v1015
    %v1031 = vmul.f32 %v1007, %v1015
    %v1032 = vmul.f32 %v994, %v1015
    %v1033 = vmul.f32 %v1008, %v1015
    %v1034 = vmul.f32 %v995, %v1015
    %v1035 = vmul.f32 %v1009, %v1015
    %v1036 = vmul.f32 %v996, %v1015
    %v1037 = vmul.f32 %v1010, %v1015
    %v1038 = vmul.f32 %v997, %v1015
    %v1039 = vmul.f32 %v1011, %v1015
    %v1040 = vadd.f32 %v934, %v1016
    %v1041 = vadd.f32 %v935, %v1017
    %v1042 = vadd.f32 %v936, %v1018
    %v1043 = vadd.f32 %v937, %v1019
    %v1044 = vadd.f32 %v938, %v1020
    %v1045 = vadd.f32 %v939, %v1021
    %v1046 = vadd.f32 %v940, %v1022
    %v1047 = vadd.f32 %v941, %v1023
    %v1048 = vadd.f32 %v942, %v1024
    %v1049 = vadd.f32 %v943, %v1025
    %v1050 = vadd.f32 %v944, %v1026
    %v1051 = vadd.f32 %v945, %v1027
    %v1052 = vadd.f32 %v946, %v1028
    %v1053 = vadd.f32 %v947, %v1029
    %v1054 = vadd.f32 %v948, %v1030
    %v1055 = vadd.f32 %v949, %v1031
    %v1056 = vadd.f32 %v950, %v1032
    %v1057 = vadd.f32 %v951, %v1033
    %v1058 = vadd.f32 %v952, %v1034
    %v1059 = vadd.f32 %v953, %v1035
    %v1060 = vadd.f32 %v954, %v1036
    %v1061 = vadd.f32 %v955, %v1037
    %v1062 = vadd.f32 %v956, %v1038
    %v1063 = vadd.f32 %v957, %v1039
    %s1064 = sld [smem:[#allocation9 + $0x4]]
    %v1065 = vstv %s1064
    %v1066 = vmul.f32 %v987, %v1065
    %v1067 = vmul.f32 %v1001, %v1065
    %v1068 = vmul.f32 %v988, %v1065
    %v1069 = vmul.f32 %v1002, %v1065
    %v1070 = vmul.f32 %v989, %v1065
    %v1071 = vmul.f32 %v1003, %v1065
    %v1072 = vmul.f32 %v990, %v1065
    %v1073 = vmul.f32 %v1004, %v1065
    %v1074 = vmul.f32 %v991, %v1065
    %v1075 = vmul.f32 %v1005, %v1065
    %v1076 = vmul.f32 %v992, %v1065
    %v1077 = vmul.f32 %v1006, %v1065
    %v1078 = vmul.f32 %v993, %v1065
    %v1079 = vmul.f32 %v1007, %v1065
    %v1080 = vmul.f32 %v994, %v1065
    %v1081 = vmul.f32 %v1008, %v1065
    %v1082 = vmul.f32 %v995, %v1065
    %v1083 = vmul.f32 %v1009, %v1065
    %v1084 = vmul.f32 %v996, %v1065
    %v1085 = vmul.f32 %v1010, %v1065
    %v1086 = vmul.f32 %v997, %v1065
    %v1087 = vmul.f32 %v1011, %v1065
    %v1088 = vmul.f32 %v998, %v1065
    %v1089 = vmul.f32 %v1012, %v1065
    %v1090 = vadd.f32 %v1040, %v1066
    %v1091 = vadd.f32 %v1041, %v1067
    %v1092 = vadd.f32 %v1042, %v1068
    %v1093 = vadd.f32 %v1043, %v1069
    %v1094 = vadd.f32 %v1044, %v1070
    %v1095 = vadd.f32 %v1045, %v1071
    %v1096 = vadd.f32 %v1046, %v1072
    %v1097 = vadd.f32 %v1047, %v1073
    %v1098 = vadd.f32 %v1048, %v1074
    %v1099 = vadd.f32 %v1049, %v1075
    %v1100 = vadd.f32 %v1050, %v1076
    %v1101 = vadd.f32 %v1051, %v1077
    %v1102 = vadd.f32 %v1052, %v1078
    %v1103 = vadd.f32 %v1053, %v1079
    %v1104 = vadd.f32 %v1054, %v1080
    %v1105 = vadd.f32 %v1055, %v1081
    %v1106 = vadd.f32 %v1056, %v1082
    %v1107 = vadd.f32 %v1057, %v1083
    %v1108 = vadd.f32 %v1058, %v1084
    %v1109 = vadd.f32 %v1059, %v1085
    %v1110 = vadd.f32 %v1060, %v1086
    %v1111 = vadd.f32 %v1061, %v1087
    %v1112 = vadd.f32 %v1062, %v1088
    %v1113 = vadd.f32 %v1063, %v1089
    %s1114 = sld [smem:[#allocation9 + $0x7]]
    %v1115 = vstv %s1114
    %v1116 = vmul.f32 %v988, %v1115
    %v1117 = vmul.f32 %v1002, %v1115
    %v1118 = vmul.f32 %v989, %v1115
    %v1119 = vmul.f32 %v1003, %v1115
    %v1120 = vmul.f32 %v990, %v1115
    %v1121 = vmul.f32 %v1004, %v1115
    %v1122 = vmul.f32 %v991, %v1115
    %v1123 = vmul.f32 %v1005, %v1115
    %v1124 = vmul.f32 %v992, %v1115
    %v1125 = vmul.f32 %v1006, %v1115
    %v1126 = vmul.f32 %v993, %v1115
    %v1127 = vmul.f32 %v1007, %v1115
    %v1128 = vmul.f32 %v994, %v1115
    %v1129 = vmul.f32 %v1008, %v1115
    %v1130 = vmul.f32 %v995, %v1115
    %v1131 = vmul.f32 %v1009, %v1115
    %v1132 = vmul.f32 %v996, %v1115
    %v1133 = vmul.f32 %v1010, %v1115
    %v1134 = vmul.f32 %v997, %v1115
    %v1135 = vmul.f32 %v1011, %v1115
    %v1136 = vmul.f32 %v998, %v1115
    %v1137 = vmul.f32 %v1012, %v1115
    %v1138 = vmul.f32 %v999, %v1115
    %v1139 = vmul.f32 %v1013, %v1115
    %v1140 = vadd.f32 %v1090, %v1116
    %v1141 = vadd.f32 %v1091, %v1117
    %v1142 = vadd.f32 %v1092, %v1118
    %v1143 = vadd.f32 %v1093, %v1119
    %v1144 = vadd.f32 %v1094, %v1120
    %v1145 = vadd.f32 %v1095, %v1121
    %v1146 = vadd.f32 %v1096, %v1122
    %v1147 = vadd.f32 %v1097, %v1123
    %v1148 = vadd.f32 %v1098, %v1124
    %v1149 = vadd.f32 %v1099, %v1125
    %v1150 = vadd.f32 %v1100, %v1126
    %v1151 = vadd.f32 %v1101, %v1127
    %v1152 = vadd.f32 %v1102, %v1128
    %v1153 = vadd.f32 %v1103, %v1129
    %v1154 = vadd.f32 %v1104, %v1130
    %v1155 = vadd.f32 %v1105, %v1131
    %v1156 = vadd.f32 %v1106, %v1132
    %v1157 = vadd.f32 %v1107, %v1133
    %v1158 = vadd.f32 %v1108, %v1134
    %v1159 = vadd.f32 %v1109, %v1135
    %v1160 = vadd.f32 %v1110, %v1136
    %v1161 = vadd.f32 %v1111, %v1137
    %v1162 = vadd.f32 %v1112, %v1138
    %v1163 = vadd.f32 %v1113, %v1139
    %v1164 = vrot.slane %v778, 2
    %v1165 = vrot.slane %v780, 2
    %v1166 = vrot.slane %v782, 2
    %v1167 = vrot.slane %v784, 2
    %v1168 = vrot.slane %v786, 2
    %v1169 = vrot.slane %v788, 2
    %v1170 = vrot.slane %v790, 2
    %v1171 = vrot.slane %v792, 2
    %v1172 = vrot.slane %v794, 2
    %v1173 = vrot.slane %v796, 2
    %v1174 = vrot.slane %v798, 2
    %v1175 = vrot.slane %v800, 2
    %v1176 = vrot.slane %v802, 2
    %v1177 = vrot.slane %v804, 2
    %v1178 = vrot.slane %v779, 2
    %v1179 = vrot.slane %v781, 2
    %v1180 = vrot.slane %v783, 2
    %v1181 = vrot.slane %v785, 2
    %v1182 = vrot.slane %v787, 2
    %v1183 = vrot.slane %v789, 2
    %v1184 = vrot.slane %v791, 2
    %v1185 = vrot.slane %v793, 2
    %v1186 = vrot.slane %v795, 2
    %v1187 = vrot.slane %v797, 2
    %v1188 = vrot.slane %v799, 2
    %v1189 = vrot.slane %v801, 2
    %v1190 = vrot.slane %v803, 2
    %v1191 = vrot.slane %v805, 2
    %v1192 = vsel %vm543, %v1164, %v1178
    %v1193 = vsel %vm543, %v1165, %v1179
    %v1194 = vsel %vm543, %v1166, %v1180
    %v1195 = vsel %vm543, %v1167, %v1181
    %v1196 = vsel %vm543, %v1168, %v1182
    %v1197 = vsel %vm543, %v1169, %v1183
    %v1198 = vsel %vm543, %v1170, %v1184
    %v1199 = vsel %vm543, %v1171, %v1185
    %v1200 = vsel %vm543, %v1172, %v1186
    %v1201 = vsel %vm543, %v1173, %v1187
    %v1202 = vsel %vm543, %v1174, %v1188
    %v1203 = vsel %vm543, %v1175, %v1189
    %v1204 = vsel %vm543, %v1176, %v1190
    %v1205 = vsel %vm543, %v1177, %v1191
    %v1206 = vsel %vm543, %v1178, %v1164
    %v1207 = vsel %vm543, %v1179, %v1165
    %v1208 = vsel %vm543, %v1180, %v1166
    %v1209 = vsel %vm543, %v1181, %v1167
    %v1210 = vsel %vm543, %v1182, %v1168
    %v1211 = vsel %vm543, %v1183, %v1169
    %v1212 = vsel %vm543, %v1184, %v1170
    %v1213 = vsel %vm543, %v1185, %v1171
    %v1214 = vsel %vm543, %v1186, %v1172
    %v1215 = vsel %vm543, %v1187, %v1173
    %v1216 = vsel %vm543, %v1188, %v1174
    %v1217 = vsel %vm543, %v1189, %v1175
    %v1218 = vsel %vm543, %v1190, %v1176
    %v1219 = vsel %vm543, %v1191, %v1177
    %s1220 = sld [smem:[#allocation9 + $0x2]]
    %v1221 = vstv %s1220
    %v1222 = vmul.f32 %v1192, %v1221
    %v1223 = vmul.f32 %v1206, %v1221
    %v1224 = vmul.f32 %v1193, %v1221
    %v1225 = vmul.f32 %v1207, %v1221
    %v1226 = vmul.f32 %v1194, %v1221
    %v1227 = vmul.f32 %v1208, %v1221
    %v1228 = vmul.f32 %v1195, %v1221
    %v1229 = vmul.f32 %v1209, %v1221
    %v1230 = vmul.f32 %v1196, %v1221
    %v1231 = vmul.f32 %v1210, %v1221
    %v1232 = vmul.f32 %v1197, %v1221
    %v1233 = vmul.f32 %v1211, %v1221
    %v1234 = vmul.f32 %v1198, %v1221
    %v1235 = vmul.f32 %v1212, %v1221
    %v1236 = vmul.f32 %v1199, %v1221
    %v1237 = vmul.f32 %v1213, %v1221
    %v1238 = vmul.f32 %v1200, %v1221
    %v1239 = vmul.f32 %v1214, %v1221
    %v1240 = vmul.f32 %v1201, %v1221
    %v1241 = vmul.f32 %v1215, %v1221
    %v1242 = vmul.f32 %v1202, %v1221
    %v1243 = vmul.f32 %v1216, %v1221
    %v1244 = vmul.f32 %v1203, %v1221
    %v1245 = vmul.f32 %v1217, %v1221
    %v1246 = vadd.f32 %v1140, %v1222
    %v1247 = vadd.f32 %v1141, %v1223
    %v1248 = vadd.f32 %v1142, %v1224
    %v1249 = vadd.f32 %v1143, %v1225
    %v1250 = vadd.f32 %v1144, %v1226
    %v1251 = vadd.f32 %v1145, %v1227
    %v1252 = vadd.f32 %v1146, %v1228
    %v1253 = vadd.f32 %v1147, %v1229
    %v1254 = vadd.f32 %v1148, %v1230
    %v1255 = vadd.f32 %v1149, %v1231
    %v1256 = vadd.f32 %v1150, %v1232
    %v1257 = vadd.f32 %v1151, %v1233
    %v1258 = vadd.f32 %v1152, %v1234
    %v1259 = vadd.f32 %v1153, %v1235
    %v1260 = vadd.f32 %v1154, %v1236
    %v1261 = vadd.f32 %v1155, %v1237
    %v1262 = vadd.f32 %v1156, %v1238
    %v1263 = vadd.f32 %v1157, %v1239
    %v1264 = vadd.f32 %v1158, %v1240
    %v1265 = vadd.f32 %v1159, %v1241
    %v1266 = vadd.f32 %v1160, %v1242
    %v1267 = vadd.f32 %v1161, %v1243
    %v1268 = vadd.f32 %v1162, %v1244
    %v1269 = vadd.f32 %v1163, %v1245
    %s1270 = sld [smem:[#allocation9 + $0x5]]
    %v1271 = vstv %s1270
    %v1272 = vmul.f32 %v1193, %v1271
    %v1273 = vmul.f32 %v1207, %v1271
    %v1274 = vmul.f32 %v1194, %v1271
    %v1275 = vmul.f32 %v1208, %v1271
    %v1276 = vmul.f32 %v1195, %v1271
    %v1277 = vmul.f32 %v1209, %v1271
    %v1278 = vmul.f32 %v1196, %v1271
    %v1279 = vmul.f32 %v1210, %v1271
    %v1280 = vmul.f32 %v1197, %v1271
    %v1281 = vmul.f32 %v1211, %v1271
    %v1282 = vmul.f32 %v1198, %v1271
    %v1283 = vmul.f32 %v1212, %v1271
    %v1284 = vmul.f32 %v1199, %v1271
    %v1285 = vmul.f32 %v1213, %v1271
    %v1286 = vmul.f32 %v1200, %v1271
    %v1287 = vmul.f32 %v1214, %v1271
    %v1288 = vmul.f32 %v1201, %v1271
    %v1289 = vmul.f32 %v1215, %v1271
    %v1290 = vmul.f32 %v1202, %v1271
    %v1291 = vmul.f32 %v1216, %v1271
    %v1292 = vmul.f32 %v1203, %v1271
    %v1293 = vmul.f32 %v1217, %v1271
    %v1294 = vmul.f32 %v1204, %v1271
    %v1295 = vmul.f32 %v1218, %v1271
    %v1296 = vadd.f32 %v1246, %v1272
    %v1297 = vadd.f32 %v1247, %v1273
    %v1298 = vadd.f32 %v1248, %v1274
    %v1299 = vadd.f32 %v1249, %v1275
    %v1300 = vadd.f32 %v1250, %v1276
    %v1301 = vadd.f32 %v1251, %v1277
    %v1302 = vadd.f32 %v1252, %v1278
    %v1303 = vadd.f32 %v1253, %v1279
    %v1304 = vadd.f32 %v1254, %v1280
    %v1305 = vadd.f32 %v1255, %v1281
    %v1306 = vadd.f32 %v1256, %v1282
    %v1307 = vadd.f32 %v1257, %v1283
    %v1308 = vadd.f32 %v1258, %v1284
    %v1309 = vadd.f32 %v1259, %v1285
    %v1310 = vadd.f32 %v1260, %v1286
    %v1311 = vadd.f32 %v1261, %v1287
    %v1312 = vadd.f32 %v1262, %v1288
    %v1313 = vadd.f32 %v1263, %v1289
    %v1314 = vadd.f32 %v1264, %v1290
    %v1315 = vadd.f32 %v1265, %v1291
    %v1316 = vadd.f32 %v1266, %v1292
    %v1317 = vadd.f32 %v1267, %v1293
    %v1318 = vadd.f32 %v1268, %v1294
    %v1319 = vadd.f32 %v1269, %v1295
    %s1320 = sld [smem:[#allocation9 + $0x8]]
    %v1321 = vstv %s1320
    %v1322 = vmul.f32 %v1194, %v1321
    %v1323 = vmul.f32 %v1208, %v1321
    %v1324 = vmul.f32 %v1195, %v1321
    %v1325 = vmul.f32 %v1209, %v1321
    %v1326 = vmul.f32 %v1196, %v1321
    %v1327 = vmul.f32 %v1210, %v1321
    %v1328 = vmul.f32 %v1197, %v1321
    %v1329 = vmul.f32 %v1211, %v1321
    %v1330 = vmul.f32 %v1198, %v1321
    %v1331 = vmul.f32 %v1212, %v1321
    %v1332 = vmul.f32 %v1199, %v1321
    %v1333 = vmul.f32 %v1213, %v1321
    %v1334 = vmul.f32 %v1200, %v1321
    %v1335 = vmul.f32 %v1214, %v1321
    %v1336 = vmul.f32 %v1201, %v1321
    %v1337 = vmul.f32 %v1215, %v1321
    %v1338 = vmul.f32 %v1202, %v1321
    %v1339 = vmul.f32 %v1216, %v1321
    %v1340 = vmul.f32 %v1203, %v1321
    %v1341 = vmul.f32 %v1217, %v1321
    %v1342 = vmul.f32 %v1204, %v1321
    %v1343 = vmul.f32 %v1218, %v1321
    %v1344 = vmul.f32 %v1205, %v1321
    %v1345 = vmul.f32 %v1219, %v1321
    %v1346 = vadd.f32 %v1296, %v1322
    %v1347 = vadd.f32 %v1297, %v1323
    %v1348 = vadd.f32 %v1298, %v1324
    %v1349 = vadd.f32 %v1299, %v1325
    %v1350 = vadd.f32 %v1300, %v1326
    %v1351 = vadd.f32 %v1301, %v1327
    %v1352 = vadd.f32 %v1302, %v1328
    %v1353 = vadd.f32 %v1303, %v1329
    %v1354 = vadd.f32 %v1304, %v1330
    %v1355 = vadd.f32 %v1305, %v1331
    %v1356 = vadd.f32 %v1306, %v1332
    %v1357 = vadd.f32 %v1307, %v1333
    %v1358 = vadd.f32 %v1308, %v1334
    %v1359 = vadd.f32 %v1309, %v1335
    %v1360 = vadd.f32 %v1310, %v1336
    %v1361 = vadd.f32 %v1311, %v1337
    %v1362 = vadd.f32 %v1312, %v1338
    %v1363 = vadd.f32 %v1313, %v1339
    %v1364 = vadd.f32 %v1314, %v1340
    %v1365 = vadd.f32 %v1315, %v1341
    %v1366 = vadd.f32 %v1316, %v1342
    %v1367 = vadd.f32 %v1317, %v1343
    %v1368 = vadd.f32 %v1318, %v1344
    %v1369 = vadd.f32 %v1319, %v1345
    %v1370 = vmul.f32 %v1346, 0.2
    %v1371 = vmul.f32 %v1347, 0.2
    %v1372 = vmul.f32 %v1348, 0.2
    %v1373 = vmul.f32 %v1349, 0.2
    %v1374 = vmul.f32 %v1350, 0.2
    %v1375 = vmul.f32 %v1351, 0.2
    %v1376 = vmul.f32 %v1352, 0.2
    %v1377 = vmul.f32 %v1353, 0.2
    %v1378 = vmul.f32 %v1354, 0.2
    %v1379 = vmul.f32 %v1355, 0.2
    %v1380 = vmul.f32 %v1356, 0.2
    %v1381 = vmul.f32 %v1357, 0.2
    %v1382 = vmul.f32 %v1358, 0.2
    %v1383 = vmul.f32 %v1359, 0.2
    %v1384 = vmul.f32 %v1360, 0.2
    %v1385 = vmul.f32 %v1361, 0.2
    %v1386 = vmul.f32 %v1362, 0.2
    %v1387 = vmul.f32 %v1363, 0.2
    %v1388 = vmul.f32 %v1364, 0.2
    %v1389 = vmul.f32 %v1365, 0.2
    %v1390 = vmul.f32 %v1366, 0.2
    %v1391 = vmul.f32 %v1367, 0.2
    %v1392 = vmul.f32 %v1368, 0.2
    %v1393 = vmul.f32 %v1369, 0.2
    %v1394 = vmax.f32 %v1346, %v1370
    %v1395 = vmax.f32 %v1347, %v1371
    %v1396 = vmax.f32 %v1348, %v1372
    %v1397 = vmax.f32 %v1349, %v1373
    %v1398 = vmax.f32 %v1350, %v1374
    %v1399 = vmax.f32 %v1351, %v1375
    %v1400 = vmax.f32 %v1352, %v1376
    %v1401 = vmax.f32 %v1353, %v1377
    %v1402 = vmax.f32 %v1354, %v1378
    %v1403 = vmax.f32 %v1355, %v1379
    %v1404 = vmax.f32 %v1356, %v1380
    %v1405 = vmax.f32 %v1357, %v1381
    %v1406 = vmax.f32 %v1358, %v1382
    %v1407 = vmax.f32 %v1359, %v1383
    %v1408 = vmax.f32 %v1360, %v1384
    %v1409 = vmax.f32 %v1361, %v1385
    %v1410 = vmax.f32 %v1362, %v1386
    %v1411 = vmax.f32 %v1363, %v1387
    %v1412 = vmax.f32 %v1364, %v1388
    %v1413 = vmax.f32 %v1365, %v1389
    %v1414 = vmax.f32 %v1366, %v1390
    %v1415 = vmax.f32 %v1367, %v1391
    %v1416 = vmax.f32 %v1368, %v1392
    %v1417 = vmax.f32 %v1369, %v1393
    %1418 = vst [vmem:[#allocation11] sm:$0xff] %v1394
    %1419 = vst [vmem:[#allocation11 + $0x8] sm:$0xf] %v1395
    %1420 = vst [vmem:[#allocation11 + $0x10] sm:$0xff] %v1396
    %1421 = vst [vmem:[#allocation11 + $0x18] sm:$0xf] %v1397
    %1422 = vst [vmem:[#allocation11 + $0x20] sm:$0xff] %v1398
    %1423 = vst [vmem:[#allocation11 + $0x28] sm:$0xf] %v1399
    %1424 = vst [vmem:[#allocation11 + $0x30] sm:$0xff] %v1400
    %1425 = vst [vmem:[#allocation11 + $0x38] sm:$0xf] %v1401
    %1426 = vst [vmem:[#allocation11 + $0x40] sm:$0xff] %v1402
    %1427 = vst [vmem:[#allocation11 + $0x48] sm:$0xf] %v1403
    %1428 = vst [vmem:[#allocation11 + $0x50] sm:$0xff] %v1404
    %1429 = vst [vmem:[#allocation11 + $0x58] sm:$0xf] %v1405
    %1430 = vst [vmem:[#allocation11 + $0x60] sm:$0xff] %v1406
    %1431 = vst [vmem:[#allocation11 + $0x68] sm:$0xf] %v1407
    %1432 = vst [vmem:[#allocation11 + $0x70] sm:$0xff] %v1408
    %1433 = vst [vmem:[#allocation11 + $0x78] sm:$0xf] %v1409
    %1434 = vst [vmem:[#allocation11 + $0x80] sm:$0xff] %v1410
    %1435 = vst [vmem:[#allocation11 + $0x88] sm:$0xf] %v1411
    %1436 = vst [vmem:[#allocation11 + $0x90] sm:$0xff] %v1412
    %1437 = vst [vmem:[#allocation11 + $0x98] sm:$0xf] %v1413
    %1438 = vst [vmem:[#allocation11 + $0xa0] sm:$0xff] %v1414
    %1439 = vst [vmem:[#allocation11 + $0xa8] sm:$0xf] %v1415
    %1440 = vst [vmem:[#allocation11 + $0xb0] sm:$0xff] %v1416
    %1441 = vst [vmem:[#allocation11 + $0xb8] sm:$0xf] %v1417
    // Predicated region
    $region34: #{tpu_custom_call.1} parent=1 // pred_check
      _
    $region35: #{tpu_custom_call.1} parent=1 // pred_check_branch
      %1443 = sbr.rel (0) target = $region37
    $region36: #{tpu_custom_call.1} parent=1 // pred_region
      %s1445 = ssub.s32 3072, 3072
      %1446 = vsyncadd [#allocation6], %s1445
      %s1447 = sshll.u32 [#allocation11], 4
      %s1448 = int_to_ptr.vmem [resolvable:$true] %s1447
      %1453 = dma.vmem_to_hbm [thread:$0]  %s1448, 3072, %s5, [#allocation6], 128, 128, 8
    $region37: #{tpu_custom_call.1} parent=1 // pred_fallthru
      _
    // Predicated region
    $region38: #{tpu_custom_call.1} parent=1 // pred_check
      _
    $region39: #{tpu_custom_call.1} parent=1 // pred_check_branch
      %1455 = sbr.rel (0) target = $region41
    $region40: #{tpu_custom_call.1} parent=1 // pred_region
      %1456 = dma.done [#allocation6], 3072
    $region41: #{tpu_custom_call.1} parent=1 // pred_fallthru
      _
    %1457 = vsyncpa [#allocation5], 1
    %1458 = vsyncpa [#allocation6], 1
    %1459 = vsyncpa [#allocation7], 1
    %1460 = vsyncpa [#allocation10], 1

</llo_original>
